<compile_context>
chip_gen: v6e
topology: v6e:2x2x1
jax: 0.10.0
libtpu: 0.0.40
codegen_flags: <defaults>
</compile_context>

<pallas_src>
import math
import functools

import jax
import jax.numpy as jnp
from jax import lax
from jax.experimental import pallas as pl
from jax.experimental.pallas import tpu as pltpu

EPS = 1e-8  # GlobalLayerNorm epsilon


@functools.lru_cache(maxsize=None)
def _vmem_limit_bytes():
    """Per-generation scoped-VMEM budget: physical capacity minus headroom."""
    cap = 128 * 1024 * 1024
    try:
        info = pltpu.get_tpu_info()
        cap = int(getattr(info, "vmem_capacity_bytes", cap))
    except Exception:
        pass
    return max(32 * 1024 * 1024, cap - 16 * 1024 * 1024)


# ------------------------- global layer norm kernel --------------------------

def _gln_kernel(x_ref, g_ref, b_ref, o_ref):
    # One-pass global layer norm over the whole (T, D) slab of one batch element.
    x = x_ref[...]                                        # (1, T, D) f32
    mean = jnp.mean(x, axis=(1, 2), keepdims=True)
    meansq = jnp.mean(x * x, axis=(1, 2), keepdims=True)
    var = meansq - mean * mean
    xc = x - mean
    o_ref[...] = (g_ref[...] * xc * lax.rsqrt(var + EPS)
                  + b_ref[...]).astype(o_ref.dtype)


def global_layer_norm(x, gamma, beta):
    # TODO(synk): tile the (T, D) reduction over a T grid axis for very long T.
    B, T, D = x.shape
    return pl.pallas_call(
        _gln_kernel,
        out_shape=jax.ShapeDtypeStruct((B, T, D), jnp.bfloat16),
        grid=(B,),
        in_specs=[pl.BlockSpec((1, T, D), lambda b: (b, 0, 0)),
                  pl.BlockSpec((1, 1, D), lambda b: (0, 0, 0)),
                  pl.BlockSpec((1, 1, D), lambda b: (0, 0, 0))],
        out_specs=pl.BlockSpec((1, T, D), lambda b: (b, 0, 0)),
        compiler_params=pltpu.CompilerParams(
            dimension_semantics=("parallel",),
            vmem_limit_bytes=_vmem_limit_bytes()),
    )(x, gamma.reshape(1, 1, D), beta.reshape(1, 1, D))


# ------------------------- tiled projection (matmul) -------------------------

def _matmul_kernel(x_ref, w_ref, b_ref, o_ref):
    # Single K block: no accumulator scratch, no init/finalize phases.
    o_ref[...] = (jnp.dot(x_ref[...], w_ref[...],
                          preferred_element_type=jnp.float32)
                  + b_ref[...]).astype(o_ref.dtype)


def _matmul_kernel_kloop(x_ref, w_ref, b_ref, o_ref, acc_ref):
    k = pl.program_id(2)

    @pl.when(k == 0)
    def _():
        acc_ref[...] = jnp.zeros_like(acc_ref)

    acc_ref[...] += jnp.dot(x_ref[...], w_ref[...],
                            preferred_element_type=jnp.float32)

    @pl.when(k == pl.num_programs(2) - 1)
    def _():
        o_ref[...] = (acc_ref[...] + b_ref[...]).astype(o_ref.dtype)


def _pick_tile(dim, target, align):
    """Largest `align`-multiple divisor of `dim` that is <= target.

    Falls back to the full dimension only when no aligned divisor exists (always
    legal for BlockSpec).  Avoids the old full-dim cliff for e.g. dim=3000.
    """
    if dim <= target:
        return dim
    t = (target // align) * align
    while t >= align:
        if dim % t == 0:
            return t
        t -= align
    return dim


def matmul_bias(x, w, bias, *, out_dtype, tm=512, tn=512, tk=512):
    """y = x @ w + bias.  x:(M,K) bf16, w:(K,N) bf16, bias:(1,N) f32."""
    M, K = x.shape
    _, N = w.shape
    tm = _pick_tile(M, tm, 8)
    tn = _pick_tile(N, tn, 128)
    tk = _pick_tile(K, tk, 128)
    vmem = _vmem_limit_bytes()

    if tk == K:
        # Typical Conformer d_model fits one K tile: drop the reduction axis.
        return pl.pallas_call(
            _matmul_kernel,
            out_shape=jax.ShapeDtypeStruct((M, N), out_dtype),
            grid=(M // tm, N // tn),
            in_specs=[pl.BlockSpec((tm, K), lambda m, n: (m, 0)),
                      pl.BlockSpec((K, tn), lambda m, n: (0, n)),
                      pl.BlockSpec((1, tn), lambda m, n: (0, n))],
            out_specs=pl.BlockSpec((tm, tn), lambda m, n: (m, n)),
            compiler_params=pltpu.CompilerParams(
                dimension_semantics=("parallel", "parallel"),
                vmem_limit_bytes=vmem),
        )(x, w, bias)

    return pl.pallas_call(
        _matmul_kernel_kloop,
        out_shape=jax.ShapeDtypeStruct((M, N), out_dtype),
        grid=(M // tm, N // tn, K // tk),
        in_specs=[pl.BlockSpec((tm, tk), lambda m, n, k: (m, k)),
                  pl.BlockSpec((tk, tn), lambda m, n, k: (k, n)),
                  pl.BlockSpec((1, tn), lambda m, n, k: (0, n))],
        out_specs=pl.BlockSpec((tm, tn), lambda m, n, k: (m, n)),
        scratch_shapes=[pltpu.VMEM((tm, tn), jnp.float32)],
        compiler_params=pltpu.CompilerParams(
            dimension_semantics=("parallel", "parallel", "arbitrary"),
            vmem_limit_bytes=vmem),
    )(x, w, bias)


# -------------------- fused relative-position attention ----------------------

def _attn_kernel(q_ref, k_ref, v_ref, p_ref, u_ref, vb_ref, o_ref, *, inv_sqrt_dim):
    """One (batch, head) pair per grid step.

    score[i, j] = (q_i + u) . k_j / sqrt(D)  +  rel_shift((q + v_b) @ p^T)[i, j] / sqrt(D)
    out = softmax(score) @ v
    The scale is folded into q (T x d_head pass) before the matmuls.
    """
    T = q_ref.shape[2]

    q = q_ref[0, 0].astype(jnp.float32)                  # (T, Dh)
    u = u_ref[0].astype(jnp.float32)                     # (1, Dh)
    vb = vb_ref[0].astype(jnp.float32)                   # (1, Dh)
    qu = ((q + u) * inv_sqrt_dim).astype(jnp.bfloat16)
    qv = ((q + vb) * inv_sqrt_dim).astype(jnp.bfloat16)

    k = k_ref[0, 0]                                      # (T, Dh) bf16
    vv = v_ref[0, 0]                                     # (T, Dh) bf16
    ph = p_ref[0]                                        # (T, Dh) bf16

    content = lax.dot_general(qu, k, (((1,), (1,)), ((), ())),
                              preferred_element_type=jnp.float32)   # (T, T)
    pos = lax.dot_general(qv, ph, (((1,), (1,)), ((), ())),
                          preferred_element_type=jnp.float32)       # (T, T)

    # ---- Transformer-XL relative shift of the (T, T) pos tile ----
    # Equivalent to: pad a zero column, reshape (T, T+1) -> (T+1, T), drop row 0.
    # Closed form:  out[i, j] = pos[i,   T-1-i+j]  for j <= i
    #             = 0                              for j == i+1
    #             = pos[i+1, j-i-2]                for j >= i+2
    # Index machinery built once per grid step (heads are a grid axis now).
    row = lax.broadcasted_iota(jnp.int32, (T, T), 0)
    col = lax.broadcasted_iota(jnp.int32, (T, T), 1)
    amt = jnp.where(row + 1 == T, 0, row + 1)            # per-row right-roll amount

    r = pos
    s = 1
    while s < T:                                         # barrel shifter (log2 T stages)
        rolled = jnp.concatenate([r[:, T - s:], r[:, :T - s]], axis=1)
        r = jnp.where((amt & s) != 0, rolled, r)
        s *= 2
    # r[i, j] == pos[i, (j - (i+1)) mod T]
    rdown = jnp.concatenate([r[1:, :], r[:1, :]], axis=0)  # r shifted one row up
    shifted = jnp.where(col <= row, r,
                        jnp.where(col >= row + 2, rdown, jnp.zeros_like(r)))

    score = content + shifted                            # scale already folded into q
    score = score - jnp.max(score, axis=-1, keepdims=True)
    e = jnp.exp(score)
    denom = jnp.sum(e, axis=-1, keepdims=True)
    attn = (e * pl.reciprocal(denom, approx=True)).astype(jnp.bfloat16)

    o_ref[0, 0] = jnp.dot(attn, vv,
                          preferred_element_type=jnp.float32).astype(o_ref.dtype)


def fused_attention(q, k, v, p, u_bias, v_bias, *, d_model):
    """q/k/v: (B, H, T, Dh) bf16, p: (H, T, Dh) bf16, biases: (H, 1, Dh) f32."""
    B, H, T, Dh = q.shape
    kern = functools.partial(_attn_kernel, inv_sqrt_dim=1.0 / math.sqrt(d_model))
    return pl.pallas_call(
        kern,
        out_shape=jax.ShapeDtypeStruct((B, H, T, Dh), jnp.bfloat16),
        grid=(B, H),
        in_specs=[pl.BlockSpec((1, 1, T, Dh), lambda b, h: (b, h, 0, 0)),   # q
                  pl.BlockSpec((1, 1, T, Dh), lambda b, h: (b, h, 0, 0)),   # k
                  pl.BlockSpec((1, 1, T, Dh), lambda b, h: (b, h, 0, 0)),   # v
                  pl.BlockSpec((1, T, Dh), lambda b, h: (h, 0, 0)),         # pos
                  pl.BlockSpec((1, 1, Dh), lambda b, h: (h, 0, 0)),         # u bias
                  pl.BlockSpec((1, 1, Dh), lambda b, h: (h, 0, 0))],        # v bias
        out_specs=pl.BlockSpec((1, 1, T, Dh), lambda b, h: (b, h, 0, 0)),
        compiler_params=pltpu.CompilerParams(
            dimension_semantics=("parallel", "parallel"),
            vmem_limit_bytes=_vmem_limit_bytes()),
    )(q, k, v, p, u_bias, v_bias)


# --------------------------------- JAX glue ----------------------------------

def positional_encoding(length, d_model):
    position = jnp.arange(length, dtype=jnp.float32)[:, None]
    div_term = jnp.exp(jnp.arange(0, d_model, 2, dtype=jnp.float32)
                       * (-math.log(10000.0) / d_model))
    pe = jnp.zeros((length, d_model), jnp.float32)
    pe = pe.at[:, 0::2].set(jnp.sin(position * div_term))
    pe = pe.at[:, 1::2].set(jnp.cos(position * div_term))
    return pe


def relative_shift_ref(pos_score):
    # Reference-only reproduction of RelativeMultiHeadAttention._relative_shift.
    B, H, T1, T2 = pos_score.shape
    zeros = jnp.zeros((B, H, T1, 1), pos_score.dtype)
    padded = jnp.concatenate([zeros, pos_score], axis=-1)
    padded = padded.reshape(B, H, T2 + 1, T1)
    return padded[:, :, 1:].reshape(B, H, T1, T2)


def init_params(key, d_model, num_heads):
    d_head = d_model // num_heads
    ks = jax.random.split(key, 8)

    def lin(k, din, dout):
        kw, kb = jax.random.split(k)
        bound = 1.0 / math.sqrt(din)
        w = jax.random.uniform(kw, (dout, din), jnp.float32, -bound, bound)
        b = jax.random.uniform(kb, (dout,), jnp.float32, -bound, bound)
        return w, b

    p = {}
    p['Wq'], p['bq'] = lin(ks[0], d_model, d_model)
    p['Wk'], p['bk'] = lin(ks[1], d_model, d_model)
    p['Wv'], p['bv'] = lin(ks[2], d_model, d_model)
    p['Wp'], _ = lin(ks[3], d_model, d_model)            # pos_proj has no bias
    p['Wo'], p['bo'] = lin(ks[4], d_model, d_model)
    xb = math.sqrt(6.0 / (num_heads + d_head))           # xavier_uniform
    p['u_bias'] = jax.random.uniform(ks[5], (num_heads, d_head), jnp.float32, -xb, xb)
    p['v_bias'] = jax.random.uniform(ks[6], (num_heads, d_head), jnp.float32, -xb, xb)
    p['gamma'] = jnp.ones((d_model,), jnp.float32)
    p['beta'] = jnp.zeros((d_model,), jnp.float32)
    return p


def mhsa_forward(x, params, *, num_heads):
    B, T, D = x.shape
    H = num_heads
    Dh = D // H

    pe = positional_encoding(T, D)                                   # (T, D) f32

    # Pre-norm (Pallas).  Output carried as bf16 to halve projection HBM reads.
    xn = global_layer_norm(x, params['gamma'], params['beta'])       # (B, T, D) bf16

    # Fused Q/K/V projection: one tiled 2-D matmul with (D, 3D) weights; B folded
    # into the M axis so the leading "parallel" grid dimension is large.
    w_qkv = jnp.concatenate(
        [params['Wq'].T, params['Wk'].T, params['Wv'].T], axis=1).astype(jnp.bfloat16)
    b_qkv = jnp.concatenate(
        [params['bq'], params['bk'], params['bv']]).reshape(1, 3 * D)
    qkv2d = matmul_bias(xn.reshape(B * T, D), w_qkv, b_qkv,
                        out_dtype=jnp.bfloat16)                      # (B*T, 3D)

    # Layout plumbing (XLA): expose heads so attention BlockSpecs DMA clean
    # (T, d_head) blocks per grid step.
    qkv = qkv2d.reshape(B, T, 3, H, Dh)
    q = qkv[:, :, 0].transpose(0, 2, 1, 3)                           # (B, H, T, Dh)
    k = qkv[:, :, 1].transpose(0, 2, 1, 3)
    v = qkv[:, :, 2].transpose(0, 2, 1, 3)

    # Positional projection (no bias), shared across the batch.
    p2d = matmul_bias(pe.astype(jnp.bfloat16), params['Wp'].T.astype(jnp.bfloat16),
                      jnp.zeros((1, D), jnp.float32), out_dtype=jnp.bfloat16)  # (T, D)
    p = p2d.reshape(T, H, Dh).transpose(1, 0, 2)                     # (H, T, Dh)

    # Fused scores + relative shift + softmax + context, grid over (batch, head).
    ctx = fused_attention(q, k, v, p,
                          params['u_bias'].reshape(H, 1, Dh),
                          params['v_bias'].reshape(H, 1, Dh),
                          d_model=D)                                 # (B, H, T, Dh) bf16

    # Output projection.
    ctx2d = ctx.transpose(0, 2, 1, 3).reshape(B * T, D)
    out = matmul_bias(ctx2d, params['Wo'].T.astype(jnp.bfloat16),
                      params['bo'].reshape(1, D), out_dtype=jnp.float32)
    return out.reshape(B, T, D)                   # dropout = identity (eval)


# ----------------------------- pure-JAX reference ----------------------------

def mhsa_reference(x, params, num_heads):
    B, T, D = x.shape
    H = num_heads
    Dh = D // H
    pe = positional_encoding(T, D)
    mean = jnp.mean(x, axis=(1, 2), keepdims=True)
    var = jnp.mean((x - mean) ** 2, axis=(1, 2), keepdims=True)
    xn = params['gamma'] * (x - mean) / jnp.sqrt(var + EPS) + params['beta']
    q = (xn @ params['Wq'].T + params['bq']).reshape(B, T, H, Dh)
    k = (xn @ params['Wk'].T + params['bk']).reshape(B, T, H, Dh).transpose(0, 2, 1, 3)
    v = (xn @ params['Wv'].T + params['bv']).reshape(B, T, H, Dh).transpose(0, 2, 1, 3)
    p = (pe @ params['Wp'].T).reshape(1, T, H, Dh)
    p = jnp.broadcast_to(p, (B, T, H, Dh))
    content = jnp.einsum('bihd,bhjd->bhij', q + params['u_bias'], k)
    pos_score = jnp.einsum('bihd,bjhd->bhij', q + params['v_bias'], p)
    pos_score = relative_shift_ref(pos_score)
    score = (content + pos_score) / math.sqrt(D)
    attn = jax.nn.softmax(score, axis=-1)
    ctx = jnp.einsum('bhij,bhjd->bihd', attn, v).reshape(B, T, D)
    return ctx @ params['Wo'].T + params['bo']


# ----------------------------------- main -------------------------------------

if __name__ == "__main__":
    B, T, D, H = 2, 8, 32, 4
    key = jax.random.PRNGKey(0)
    kx, kp = jax.random.split(key)
    x = jax.random.normal(kx, (B, T, D), jnp.float32)
    params = init_params(kp, D, H)

    fwd = jax.jit(functools.partial(mhsa_forward, num_heads=H))
    out = jax.block_until_ready(fwd(x, params))

    ref = mhsa_reference(x, params, H)
    assert out.shape == (B, T, D), out.shape
    err = float(jnp.max(jnp.abs(out - ref)))
    # bf16 MXU operands with fp32 accumulation -> relaxed tolerance.
    assert err < 5e-2, f"max abs err {err}"
    print("KERNEL_OK")
</pallas_src>

<mosaic_0001>
module attributes {stable_mosaic.version = 11 : i64} {
  func.func @_gln_kernel(%arg0: i32, %arg1: memref<1x8x32xf32, #tpu.memory_space<vmem>>, %arg2: memref<1x1x32xf32, #tpu.memory_space<vmem>>, %arg3: memref<1x1x32xf32, #tpu.memory_space<vmem>>, %arg4: memref<1x8x32xbf16, #tpu.memory_space<vmem>>) attributes {dimension_semantics = [#tpu.dimension_semantics<parallel>], iteration_bounds = array<i64: 2>, scalar_prefetch = 0 : i64, scratch_operands = 0 : i64, tpu.core_type = #tpu.core_type<tc>, window_params = [{transform_indices = @transform_0, window_bounds = array<i64: 1, 8, 32>}, {pipeline_mode = #tpu.pipeline_mode<synchronous>, transform_indices = @transform_1, window_bounds = array<i64: 1, 1, 32>}, {pipeline_mode = #tpu.pipeline_mode<synchronous>, transform_indices = @transform_2, window_bounds = array<i64: 1, 1, 32>}, {transform_indices = @transform_3, window_bounds = array<i64: 1, 8, 32>}]} {
    %c0 = arith.constant 0 : index
    %c0_0 = arith.constant 0 : index
    %c0_1 = arith.constant 0 : index
    %0 = vector.load %arg1[%c0, %c0_0, %c0_1] : memref<1x8x32xf32, #tpu.memory_space<vmem>>, vector<1x8x32xf32>
    %cst = arith.constant dense<0.000000e+00> : vector<1xf32>
    %1 = vector.multi_reduction <add>, %0, %cst [1, 2] : vector<1x8x32xf32> to vector<1xf32>
    %2 = vector.shape_cast %1 : vector<1xf32> to vector<1x1x1xf32>
    %cst_2 = arith.constant 2.560000e+02 : f32
    %3 = vector.broadcast %cst_2 : f32 to vector<1x1x1xf32>
    %4 = arith.divf %2, %3 : vector<1x1x1xf32>
    %5 = arith.mulf %0, %0 : vector<1x8x32xf32>
    %cst_3 = arith.constant dense<0.000000e+00> : vector<1xf32>
    %6 = vector.multi_reduction <add>, %5, %cst_3 [1, 2] : vector<1x8x32xf32> to vector<1xf32>
    %7 = vector.shape_cast %6 : vector<1xf32> to vector<1x1x1xf32>
    %cst_4 = arith.constant 2.560000e+02 : f32
    %8 = vector.broadcast %cst_4 : f32 to vector<1x1x1xf32>
    %9 = arith.divf %7, %8 : vector<1x1x1xf32>
    %10 = arith.mulf %4, %4 : vector<1x1x1xf32>
    %11 = arith.subf %9, %10 : vector<1x1x1xf32>
    %12 = vector.broadcast %4 : vector<1x1x1xf32> to vector<1x8x32xf32>
    %13 = arith.subf %0, %12 : vector<1x8x32xf32>
    %c0_5 = arith.constant 0 : index
    %c0_6 = arith.constant 0 : index
    %c0_7 = arith.constant 0 : index
    %14 = vector.load %arg2[%c0_5, %c0_6, %c0_7] : memref<1x1x32xf32, #tpu.memory_space<vmem>>, vector<1x1x32xf32>
    %15 = vector.broadcast %14 : vector<1x1x32xf32> to vector<1x8x32xf32>
    %16 = arith.mulf %15, %13 : vector<1x8x32xf32>
    %cst_8 = arith.constant 9.99999993E-9 : f32
    %17 = vector.broadcast %cst_8 : f32 to vector<1x1x1xf32>
    %18 = arith.addf %11, %17 : vector<1x1x1xf32>
    %19 = math.rsqrt %18 : vector<1x1x1xf32>
    %20 = vector.broadcast %19 : vector<1x1x1xf32> to vector<1x8x32xf32>
    %21 = arith.mulf %16, %20 : vector<1x8x32xf32>
    %c0_9 = arith.constant 0 : index
    %c0_10 = arith.constant 0 : index
    %c0_11 = arith.constant 0 : index
    %22 = vector.load %arg3[%c0_9, %c0_10, %c0_11] : memref<1x1x32xf32, #tpu.memory_space<vmem>>, vector<1x1x32xf32>
    %23 = vector.broadcast %22 : vector<1x1x32xf32> to vector<1x8x32xf32>
    %24 = arith.addf %21, %23 : vector<1x8x32xf32>
    %25 = arith.truncf %24 : vector<1x8x32xf32> to vector<1x8x32xbf16>
    %c0_12 = arith.constant 0 : index
    %c0_13 = arith.constant 0 : index
    %c0_14 = arith.constant 0 : index
    %26 = vector.load %arg4[%c0_12, %c0_13, %c0_14] : memref<1x8x32xbf16, #tpu.memory_space<vmem>>, vector<1x8x32xbf16>
    tpu.vector_store %arg4[%c0_12, %c0_13, %c0_14], %25 {strides = array<i32>} : memref<1x8x32xbf16, #tpu.memory_space<vmem>>, vector<1x8x32xbf16>,
    return
  }
  func.func @transform_0(%arg0: i32) -> (i32, i32, i32) {
    %c0_i32 = arith.constant 0 : i32
    %c0_i32_0 = arith.constant 0 : i32
    %c0_i32_1 = arith.constant 0 : i32
    return %arg0, %c0_i32, %c0_i32_0 : i32, i32, i32
  }
  func.func @transform_1(%arg0: i32) -> (i32, i32, i32) {
    %c0_i32 = arith.constant 0 : i32
    %c0_i32_0 = arith.constant 0 : i32
    %c0_i32_1 = arith.constant 0 : i32
    %c0_i32_2 = arith.constant 0 : i32
    return %c0_i32, %c0_i32_0, %c0_i32_1 : i32, i32, i32
  }
  func.func @transform_2(%arg0: i32) -> (i32, i32, i32) {
    %c0_i32 = arith.constant 0 : i32
    %c0_i32_0 = arith.constant 0 : i32
    %c0_i32_1 = arith.constant 0 : i32
    %c0_i32_2 = arith.constant 0 : i32
    return %c0_i32, %c0_i32_0, %c0_i32_1 : i32, i32, i32
  }
  func.func @transform_3(%arg0: i32) -> (i32, i32, i32) {
    %c0_i32 = arith.constant 0 : i32
    %c0_i32_0 = arith.constant 0 : i32
    %c0_i32_1 = arith.constant 0 : i32
    return %arg0, %c0_i32, %c0_i32_0 : i32, i32, i32
  }
}

module attributes {stable_mosaic.version = 11 : i64} {
  func.func @_matmul_kernel(%arg0: i32, %arg1: i32, %arg2: memref<16x32xbf16, #tpu.memory_space<vmem>>, %arg3: memref<32x96xbf16, #tpu.memory_space<vmem>>, %arg4: memref<1x96xf32, #tpu.memory_space<vmem>>, %arg5: memref<16x96xbf16, #tpu.memory_space<vmem>>) attributes {dimension_semantics = [#tpu.dimension_semantics<parallel>, #tpu.dimension_semantics<parallel>], iteration_bounds = array<i64: 1, 1>, scalar_prefetch = 0 : i64, scratch_operands = 0 : i64, tpu.core_type = #tpu.core_type<tc>, window_params = [{transform_indices = @transform_0, window_bounds = array<i64: 16, 32>}, {transform_indices = @transform_1, window_bounds = array<i64: 32, 96>}, {transform_indices = @transform_2, window_bounds = array<i64: 1, 96>}, {transform_indices = @transform_3, window_bounds = array<i64: 16, 96>}]} {
    %c0 = arith.constant 0 : index
    %c0_0 = arith.constant 0 : index
    %0 = vector.load %arg2[%c0, %c0_0] : memref<16x32xbf16, #tpu.memory_space<vmem>>, vector<16x32xbf16>
    %c0_1 = arith.constant 0 : index
    %c0_2 = arith.constant 0 : index
    %1 = vector.load %arg3[%c0_1, %c0_2] : memref<32x96xbf16, #tpu.memory_space<vmem>>, vector<32x96xbf16>
    %cst = arith.constant dense<0.000000e+00> : vector<16x96xf32>
    %2 = tpu.matmul %0, %1, %cst {dimension_numbers = #tpu.dot_dimension_numbers<[1], [0], [0], [1], [0, 0, 1, 1], [], []>} : vector<16x32xbf16>, vector<32x96xbf16>, vector<16x96xf32> -> vector<16x96xf32>
    %c0_3 = arith.constant 0 : index
    %c0_4 = arith.constant 0 : index
    %3 = vector.load %arg4[%c0_3, %c0_4] : memref<1x96xf32, #tpu.memory_space<vmem>>, vector<1x96xf32>
    %4 = vector.broadcast %3 : vector<1x96xf32> to vector<16x96xf32>
    %5 = arith.addf %2, %4 : vector<16x96xf32>
    %6 = arith.truncf %5 : vector<16x96xf32> to vector<16x96xbf16>
    %c0_5 = arith.constant 0 : index
    %c0_6 = arith.constant 0 : index
    %7 = vector.load %arg5[%c0_5, %c0_6] : memref<16x96xbf16, #tpu.memory_space<vmem>>, vector<16x96xbf16>
    tpu.vector_store %arg5[%c0_5, %c0_6], %6 {strides = array<i32>} : memref<16x96xbf16, #tpu.memory_space<vmem>>, vector<16x96xbf16>,
    return
  }
  func.func @transform_0(%arg0: i32, %arg1: i32) -> (i32, i32) {
    %c0_i32 = arith.constant 0 : i32
    %c0_i32_0 = arith.constant 0 : i32
    return %arg0, %c0_i32 : i32, i32
  }
  func.func @transform_1(%arg0: i32, %arg1: i32) -> (i32, i32) {
    %c0_i32 = arith.constant 0 : i32
    %c0_i32_0 = arith.constant 0 : i32
    return %c0_i32, %arg1 : i32, i32
  }
  func.func @transform_2(%arg0: i32, %arg1: i32) -> (i32, i32) {
    %c0_i32 = arith.constant 0 : i32
    %c0_i32_0 = arith.constant 0 : i32
    return %c0_i32, %arg1 : i32, i32
  }
  func.func @transform_3(%arg0: i32, %arg1: i32) -> (i32, i32) {
    %c0_i32 = arith.constant 0 : i32
    return %arg0, %arg1 : i32, i32
  }
}

module attributes {stable_mosaic.version = 11 : i64} {
  func.func @_matmul_kernel(%arg0: i32, %arg1: i32, %arg2: memref<8x32xbf16, #tpu.memory_space<vmem>>, %arg3: memref<32x32xbf16, #tpu.memory_space<vmem>>, %arg4: memref<1x32xf32, #tpu.memory_space<vmem>>, %arg5: memref<8x32xbf16, #tpu.memory_space<vmem>>) attributes {dimension_semantics = [#tpu.dimension_semantics<parallel>, #tpu.dimension_semantics<parallel>], iteration_bounds = array<i64: 1, 1>, scalar_prefetch = 0 : i64, scratch_operands = 0 : i64, tpu.core_type = #tpu.core_type<tc>, window_params = [{transform_indices = @transform_0, window_bounds = array<i64: 8, 32>}, {transform_indices = @transform_1, window_bounds = array<i64: 32, 32>}, {transform_indices = @transform_2, window_bounds = array<i64: 1, 32>}, {transform_indices = @transform_3, window_bounds = array<i64: 8, 32>}]} {
    %c0 = arith.constant 0 : index
    %c0_0 = arith.constant 0 : index
    %0 = vector.load %arg2[%c0, %c0_0] : memref<8x32xbf16, #tpu.memory_space<vmem>>, vector<8x32xbf16>
    %c0_1 = arith.constant 0 : index
    %c0_2 = arith.constant 0 : index
    %1 = vector.load %arg3[%c0_1, %c0_2] : memref<32x32xbf16, #tpu.memory_space<vmem>>, vector<32x32xbf16>
    %cst = arith.constant dense<0.000000e+00> : vector<8x32xf32>
    %2 = tpu.matmul %0, %1, %cst {dimension_numbers = #tpu.dot_dimension_numbers<[1], [0], [0], [1], [0, 0, 1, 1], [], []>} : vector<8x32xbf16>, vector<32x32xbf16>, vector<8x32xf32> -> vector<8x32xf32>
    %c0_3 = arith.constant 0 : index
    %c0_4 = arith.constant 0 : index
    %3 = vector.load %arg4[%c0_3, %c0_4] : memref<1x32xf32, #tpu.memory_space<vmem>>, vector<1x32xf32>
    %4 = vector.broadcast %3 : vector<1x32xf32> to vector<8x32xf32>
    %5 = arith.addf %2, %4 : vector<8x32xf32>
    %6 = arith.truncf %5 : vector<8x32xf32> to vector<8x32xbf16>
    %c0_5 = arith.constant 0 : index
    %c0_6 = arith.constant 0 : index
    %7 = vector.load %arg5[%c0_5, %c0_6] : memref<8x32xbf16, #tpu.memory_space<vmem>>, vector<8x32xbf16>
    tpu.vector_store %arg5[%c0_5, %c0_6], %6 {strides = array<i32>} : memref<8x32xbf16, #tpu.memory_space<vmem>>, vector<8x32xbf16>,
    return
  }
  func.func @transform_0(%arg0: i32, %arg1: i32) -> (i32, i32) {
    %c0_i32 = arith.constant 0 : i32
    %c0_i32_0 = arith.constant 0 : i32
    return %arg0, %c0_i32 : i32, i32
  }
  func.func @transform_1(%arg0: i32, %arg1: i32) -> (i32, i32) {
    %c0_i32 = arith.constant 0 : i32
    %c0_i32_0 = arith.constant 0 : i32
    return %c0_i32, %arg1 : i32, i32
  }
  func.func @transform_2(%arg0: i32, %arg1: i32) -> (i32, i32) {
    %c0_i32 = arith.constant 0 : i32
    %c0_i32_0 = arith.constant 0 : i32
    return %c0_i32, %arg1 : i32, i32
  }
  func.func @transform_3(%arg0: i32, %arg1: i32) -> (i32, i32) {
    %c0_i32 = arith.constant 0 : i32
    return %arg0, %arg1 : i32, i32
  }
}

module attributes {stable_mosaic.version = 11 : i64} {
  func.func @_attn_kernel(%arg0: i32, %arg1: i32, %arg2: memref<1x1x8x8xbf16, #tpu.memory_space<vmem>>, %arg3: memref<1x1x8x8xbf16, #tpu.memory_space<vmem>>, %arg4: memref<1x1x8x8xbf16, #tpu.memory_space<vmem>>, %arg5: memref<1x8x8xbf16, #tpu.memory_space<vmem>>, %arg6: memref<1x1x8xf32, #tpu.memory_space<vmem>>, %arg7: memref<1x1x8xf32, #tpu.memory_space<vmem>>, %arg8: memref<1x1x8x8xbf16, #tpu.memory_space<vmem>>) attributes {dimension_semantics = [#tpu.dimension_semantics<parallel>, #tpu.dimension_semantics<parallel>], iteration_bounds = array<i64: 2, 4>, scalar_prefetch = 0 : i64, scratch_operands = 0 : i64, tpu.core_type = #tpu.core_type<tc>, window_params = [{transform_indices = @transform_0, window_bounds = array<i64: 1, 1, 8, 8>}, {transform_indices = @transform_1, window_bounds = array<i64: 1, 1, 8, 8>}, {transform_indices = @transform_2, window_bounds = array<i64: 1, 1, 8, 8>}, {transform_indices = @transform_3, window_bounds = array<i64: 1, 8, 8>}, {transform_indices = @transform_4, window_bounds = array<i64: 1, 1, 8>}, {transform_indices = @transform_5, window_bounds = array<i64: 1, 1, 8>}, {transform_indices = @transform_6, window_bounds = array<i64: 1, 1, 8, 8>}]} {
    %c0 = arith.constant 0 : index
    %c0_0 = arith.constant 0 : index
    %c0_1 = arith.constant 0 : index
    %c0_2 = arith.constant 0 : index
    %0 = vector.load %arg2[%c0, %c0_0, %c0_1, %c0_2] : memref<1x1x8x8xbf16, #tpu.memory_space<vmem>>, vector<1x1x8x8xbf16>
    %1 = vector.shape_cast %0 : vector<1x1x8x8xbf16> to vector<8x8xbf16>
    %2 = arith.extf %1 : vector<8x8xbf16> to vector<8x8xf32>
    %c0_3 = arith.constant 0 : index
    %c0_4 = arith.constant 0 : index
    %c0_5 = arith.constant 0 : index
    %3 = vector.load %arg6[%c0_3, %c0_4, %c0_5] : memref<1x1x8xf32, #tpu.memory_space<vmem>>, vector<1x1x8xf32>
    %4 = vector.shape_cast %3 : vector<1x1x8xf32> to vector<1x8xf32>
    %c0_6 = arith.constant 0 : index
    %c0_7 = arith.constant 0 : index
    %c0_8 = arith.constant 0 : index
    %5 = vector.load %arg7[%c0_6, %c0_7, %c0_8] : memref<1x1x8xf32, #tpu.memory_space<vmem>>, vector<1x1x8xf32>
    %6 = vector.shape_cast %5 : vector<1x1x8xf32> to vector<1x8xf32>
    %7 = vector.broadcast %4 : vector<1x8xf32> to vector<8x8xf32>
    %8 = arith.addf %2, %7 : vector<8x8xf32>
    %cst = arith.constant 0.176776692 : f32
    %9 = vector.broadcast %cst : f32 to vector<8x8xf32>
    %10 = arith.mulf %8, %9 : vector<8x8xf32>
    %11 = arith.truncf %10 : vector<8x8xf32> to vector<8x8xbf16>
    %12 = vector.broadcast %6 : vector<1x8xf32> to vector<8x8xf32>
    %13 = arith.addf %2, %12 : vector<8x8xf32>
    %cst_9 = arith.constant 0.176776692 : f32
    %14 = vector.broadcast %cst_9 : f32 to vector<8x8xf32>
    %15 = arith.mulf %13, %14 : vector<8x8xf32>
    %16 = arith.truncf %15 : vector<8x8xf32> to vector<8x8xbf16>
    %c0_10 = arith.constant 0 : index
    %c0_11 = arith.constant 0 : index
    %c0_12 = arith.constant 0 : index
    %c0_13 = arith.constant 0 : index
    %17 = vector.load %arg3[%c0_10, %c0_11, %c0_12, %c0_13] : memref<1x1x8x8xbf16, #tpu.memory_space<vmem>>, vector<1x1x8x8xbf16>
    %18 = vector.shape_cast %17 : vector<1x1x8x8xbf16> to vector<8x8xbf16>
    %c0_14 = arith.constant 0 : index
    %c0_15 = arith.constant 0 : index
    %c0_16 = arith.constant 0 : index
    %c0_17 = arith.constant 0 : index
    %19 = vector.load %arg4[%c0_14, %c0_15, %c0_16, %c0_17] : memref<1x1x8x8xbf16, #tpu.memory_space<vmem>>, vector<1x1x8x8xbf16>
    %20 = vector.shape_cast %19 : vector<1x1x8x8xbf16> to vector<8x8xbf16>
    %c0_18 = arith.constant 0 : index
    %c0_19 = arith.constant 0 : index
    %c0_20 = arith.constant 0 : index
    %21 = vector.load %arg5[%c0_18, %c0_19, %c0_20] : memref<1x8x8xbf16, #tpu.memory_space<vmem>>, vector<1x8x8xbf16>
    %22 = vector.shape_cast %21 : vector<1x8x8xbf16> to vector<8x8xbf16>
    %cst_21 = arith.constant dense<0.000000e+00> : vector<8x8xf32>
    %23 = tpu.matmul %11, %18, %cst_21 {dimension_numbers = #tpu.dot_dimension_numbers<[1], [1], [0], [0], [0, 0, 1, 0], [], []>} : vector<8x8xbf16>, vector<8x8xbf16>, vector<8x8xf32> -> vector<8x8xf32>
    %cst_22 = arith.constant dense<0.000000e+00> : vector<8x8xf32>
    %24 = tpu.matmul %16, %22, %cst_22 {dimension_numbers = #tpu.dot_dimension_numbers<[1], [1], [0], [0], [0, 0, 1, 0], [], []>} : vector<8x8xbf16>, vector<8x8xbf16>, vector<8x8xf32> -> vector<8x8xf32>
    %25 = tpu.iota {dimensions = array<i32: 0>} : vector<8x8xi32>
    %26 = tpu.iota {dimensions = array<i32: 1>} : vector<8x8xi32>
    %c1_i32 = arith.constant 1 : i32
    %27 = vector.broadcast %c1_i32 : i32 to vector<8x8xi32>
    %28 = arith.addi %25, %27 : vector<8x8xi32>
    %c8_i32 = arith.constant 8 : i32
    %29 = vector.broadcast %c8_i32 : i32 to vector<8x8xi32>
    %30 = arith.cmpi eq, %28, %29 : vector<8x8xi32>
    %c1_i32_23 = arith.constant 1 : i32
    %31 = vector.broadcast %c1_i32_23 : i32 to vector<8x8xi32>
    %32 = arith.addi %25, %31 : vector<8x8xi32>
    %c0_i32 = arith.constant 0 : i32
    %33 = vector.broadcast %c0_i32 : i32 to vector<8x8xi32>
    %34 = arith.select %30, %33, %32 : vector<8x8xi1>, vector<8x8xi32>
    %35 = vector.extract_strided_slice %24 {offsets = [0, 7], sizes = [8, 1], strides = [1, 1]} : vector<8x8xf32> to vector<8x1xf32>
    %36 = vector.extract_strided_slice %24 {offsets = [0, 0], sizes = [8, 7], strides = [1, 1]} : vector<8x8xf32> to vector<8x7xf32>
    %37 = tpu.concatenate %35, %36 in 1 : vector<8x1xf32>, vector<8x7xf32> -> vector<8x8xf32>
    %c1_i32_24 = arith.constant 1 : i32
    %38 = vector.broadcast %c1_i32_24 : i32 to vector<8x8xi32>
    %39 = arith.andi %34, %38 : vector<8x8xi32>
    %c0_i32_25 = arith.constant 0 : i32
    %40 = vector.broadcast %c0_i32_25 : i32 to vector<8x8xi32>
    %41 = arith.cmpi ne, %39, %40 : vector<8x8xi32>
    %42 = arith.select %41, %37, %24 : vector<8x8xi1>, vector<8x8xf32>
    %43 = vector.extract_strided_slice %42 {offsets = [0, 6], sizes = [8, 2], strides = [1, 1]} : vector<8x8xf32> to vector<8x2xf32>
    %44 = vector.extract_strided_slice %42 {offsets = [0, 0], sizes = [8, 6], strides = [1, 1]} : vector<8x8xf32> to vector<8x6xf32>
    %45 = tpu.concatenate %43, %44 in 1 : vector<8x2xf32>, vector<8x6xf32> -> vector<8x8xf32>
    %c2_i32 = arith.constant 2 : i32
    %46 = vector.broadcast %c2_i32 : i32 to vector<8x8xi32>
    %47 = arith.andi %34, %46 : vector<8x8xi32>
    %c0_i32_26 = arith.constant 0 : i32
    %48 = vector.broadcast %c0_i32_26 : i32 to vector<8x8xi32>
    %49 = arith.cmpi ne, %47, %48 : vector<8x8xi32>
    %50 = arith.select %49, %45, %42 : vector<8x8xi1>, vector<8x8xf32>
    %51 = vector.extract_strided_slice %50 {offsets = [0, 4], sizes = [8, 4], strides = [1, 1]} : vector<8x8xf32> to vector<8x4xf32>
    %52 = vector.extract_strided_slice %50 {offsets = [0, 0], sizes = [8, 4], strides = [1, 1]} : vector<8x8xf32> to vector<8x4xf32>
    %53 = tpu.concatenate %51, %52 in 1 : vector<8x4xf32>, vector<8x4xf32> -> vector<8x8xf32>
    %c4_i32 = arith.constant 4 : i32
    %54 = vector.broadcast %c4_i32 : i32 to vector<8x8xi32>
    %55 = arith.andi %34, %54 : vector<8x8xi32>
    %c0_i32_27 = arith.constant 0 : i32
    %56 = vector.broadcast %c0_i32_27 : i32 to vector<8x8xi32>
    %57 = arith.cmpi ne, %55, %56 : vector<8x8xi32>
    %58 = arith.select %57, %53, %50 : vector<8x8xi1>, vector<8x8xf32>
    %59 = vector.extract_strided_slice %58 {offsets = [1, 0], sizes = [7, 8], strides = [1, 1]} : vector<8x8xf32> to vector<7x8xf32>
    %60 = vector.extract_strided_slice %58 {offsets = [0, 0], sizes = [1, 8], strides = [1, 1]} : vector<8x8xf32> to vector<1x8xf32>
    %61 = tpu.concatenate %59, %60 in 0 : vector<7x8xf32>, vector<1x8xf32> -> vector<8x8xf32>
    %62 = arith.cmpi sle, %26, %25 : vector<8x8xi32>
    %c2_i32_28 = arith.constant 2 : i32
    %63 = vector.broadcast %c2_i32_28 : i32 to vector<8x8xi32>
    %64 = arith.addi %25, %63 : vector<8x8xi32>
    %65 = arith.cmpi sge, %26, %64 : vector<8x8xi32>
    %cst_29 = arith.constant 0.000000e+00 : f32
    %66 = vector.broadcast %cst_29 : f32 to vector<8x8xf32>
    %67 = arith.select %65, %61, %66 : vector<8x8xi1>, vector<8x8xf32>
    %68 = arith.select %62, %58, %67 : vector<8x8xi1>, vector<8x8xf32>
    %69 = arith.addf %23, %68 : vector<8x8xf32>
    %cst_30 = arith.constant dense<0xFF800000> : vector<8xf32>
    %70 = vector.multi_reduction <maximumf>, %69, %cst_30 [1] : vector<8x8xf32> to vector<8xf32>
    %71 = vector.shape_cast %70 : vector<8xf32> to vector<8x1xf32>
    %72 = vector.broadcast %71 : vector<8x1xf32> to vector<8x8xf32>
    %73 = arith.subf %69, %72 : vector<8x8xf32>
    %74 = math.exp %73 : vector<8x8xf32>
    %cst_31 = arith.constant dense<0.000000e+00> : vector<8xf32>
    %75 = vector.multi_reduction <add>, %74, %cst_31 [1] : vector<8x8xf32> to vector<8xf32>
    %76 = vector.shape_cast %75 : vector<8xf32> to vector<8x1xf32>
    %77 = tpu.reciprocal %76 {approx = true} : vector<8x1xf32> -> vector<8x1xf32>
    %78 = vector.broadcast %77 : vector<8x1xf32> to vector<8x8xf32>
    %79 = arith.mulf %74, %78 : vector<8x8xf32>
    %80 = arith.truncf %79 : vector<8x8xf32> to vector<8x8xbf16>
    %cst_32 = arith.constant dense<0.000000e+00> : vector<8x8xf32>
    %81 = tpu.matmul %80, %20, %cst_32 {dimension_numbers = #tpu.dot_dimension_numbers<[1], [0], [0], [1], [0, 0, 1, 1], [], []>} : vector<8x8xbf16>, vector<8x8xbf16>, vector<8x8xf32> -> vector<8x8xf32>
    %82 = arith.truncf %81 : vector<8x8xf32> to vector<8x8xbf16>
    %c0_33 = arith.constant 0 : index
    %c0_34 = arith.constant 0 : index
    %c0_35 = arith.constant 0 : index
    %c0_36 = arith.constant 0 : index
    %83 = vector.load %arg8[%c0_33, %c0_34, %c0_35, %c0_36] : memref<1x1x8x8xbf16, #tpu.memory_space<vmem>>, vector<1x1x8x8xbf16>
    %84 = vector.shape_cast %83 : vector<1x1x8x8xbf16> to vector<8x8xbf16>
    %85 = vector.shape_cast %82 : vector<8x8xbf16> to vector<1x1x8x8xbf16>
    tpu.vector_store %arg8[%c0_33, %c0_34, %c0_35, %c0_36], %85 {strides = array<i32>} : memref<1x1x8x8xbf16, #tpu.memory_space<vmem>>, vector<1x1x8x8xbf16>,
    return
  }
  func.func @transform_0(%arg0: i32, %arg1: i32) -> (i32, i32, i32, i32) {
    %c0_i32 = arith.constant 0 : i32
    %c0_i32_0 = arith.constant 0 : i32
    %c0_i32_1 = arith.constant 0 : i32
    return %arg0, %arg1, %c0_i32, %c0_i32_0 : i32, i32, i32, i32
  }
  func.func @transform_1(%arg0: i32, %arg1: i32) -> (i32, i32, i32, i32) {
    %c0_i32 = arith.constant 0 : i32
    %c0_i32_0 = arith.constant 0 : i32
    %c0_i32_1 = arith.constant 0 : i32
    return %arg0, %arg1, %c0_i32, %c0_i32_0 : i32, i32, i32, i32
  }
  func.func @transform_2(%arg0: i32, %arg1: i32) -> (i32, i32, i32, i32) {
    %c0_i32 = arith.constant 0 : i32
    %c0_i32_0 = arith.constant 0 : i32
    %c0_i32_1 = arith.constant 0 : i32
    return %arg0, %arg1, %c0_i32, %c0_i32_0 : i32, i32, i32, i32
  }
  func.func @transform_3(%arg0: i32, %arg1: i32) -> (i32, i32, i32) {
    %c0_i32 = arith.constant 0 : i32
    %c0_i32_0 = arith.constant 0 : i32
    %c0_i32_1 = arith.constant 0 : i32
    return %arg1, %c0_i32, %c0_i32_0 : i32, i32, i32
  }
  func.func @transform_4(%arg0: i32, %arg1: i32) -> (i32, i32, i32) {
    %c0_i32 = arith.constant 0 : i32
    %c0_i32_0 = arith.constant 0 : i32
    %c0_i32_1 = arith.constant 0 : i32
    return %arg1, %c0_i32, %c0_i32_0 : i32, i32, i32
  }
  func.func @transform_5(%arg0: i32, %arg1: i32) -> (i32, i32, i32) {
    %c0_i32 = arith.constant 0 : i32
    %c0_i32_0 = arith.constant 0 : i32
    %c0_i32_1 = arith.constant 0 : i32
    return %arg1, %c0_i32, %c0_i32_0 : i32, i32, i32
  }
  func.func @transform_6(%arg0: i32, %arg1: i32) -> (i32, i32, i32, i32) {
    %c0_i32 = arith.constant 0 : i32
    %c0_i32_0 = arith.constant 0 : i32
    %c0_i32_1 = arith.constant 0 : i32
    return %arg0, %arg1, %c0_i32, %c0_i32_0 : i32, i32, i32, i32
  }
}

module attributes {stable_mosaic.version = 11 : i64} {
  func.func @_matmul_kernel(%arg0: i32, %arg1: i32, %arg2: memref<16x32xbf16, #tpu.memory_space<vmem>>, %arg3: memref<32x32xbf16, #tpu.memory_space<vmem>>, %arg4: memref<1x32xf32, #tpu.memory_space<vmem>>, %arg5: memref<16x32xf32, #tpu.memory_space<vmem>>) attributes {dimension_semantics = [#tpu.dimension_semantics<parallel>, #tpu.dimension_semantics<parallel>], iteration_bounds = array<i64: 1, 1>, scalar_prefetch = 0 : i64, scratch_operands = 0 : i64, tpu.core_type = #tpu.core_type<tc>, window_params = [{transform_indices = @transform_0, window_bounds = array<i64: 16, 32>}, {transform_indices = @transform_1, window_bounds = array<i64: 32, 32>}, {transform_indices = @transform_2, window_bounds = array<i64: 1, 32>}, {transform_indices = @transform_3, window_bounds = array<i64: 16, 32>}]} {
    %c0 = arith.constant 0 : index
    %c0_0 = arith.constant 0 : index
    %0 = vector.load %arg2[%c0, %c0_0] : memref<16x32xbf16, #tpu.memory_space<vmem>>, vector<16x32xbf16>
    %c0_1 = arith.constant 0 : index
    %c0_2 = arith.constant 0 : index
    %1 = vector.load %arg3[%c0_1, %c0_2] : memref<32x32xbf16, #tpu.memory_space<vmem>>, vector<32x32xbf16>
    %cst = arith.constant dense<0.000000e+00> : vector<16x32xf32>
    %2 = tpu.matmul %0, %1, %cst {dimension_numbers = #tpu.dot_dimension_numbers<[1], [0], [0], [1], [0, 0, 1, 1], [], []>} : vector<16x32xbf16>, vector<32x32xbf16>, vector<16x32xf32> -> vector<16x32xf32>
    %c0_3 = arith.constant 0 : index
    %c0_4 = arith.constant 0 : index
    %3 = vector.load %arg4[%c0_3, %c0_4] : memref<1x32xf32, #tpu.memory_space<vmem>>, vector<1x32xf32>
    %4 = vector.broadcast %3 : vector<1x32xf32> to vector<16x32xf32>
    %5 = arith.addf %2, %4 : vector<16x32xf32>
    %c0_5 = arith.constant 0 : index
    %c0_6 = arith.constant 0 : index
    %6 = vector.load %arg5[%c0_5, %c0_6] : memref<16x32xf32, #tpu.memory_space<vmem>>, vector<16x32xf32>
    tpu.vector_store %arg5[%c0_5, %c0_6], %5 {strides = array<i32>} : memref<16x32xf32, #tpu.memory_space<vmem>>, vector<16x32xf32>,
    return
  }
  func.func @transform_0(%arg0: i32, %arg1: i32) -> (i32, i32) {
    %c0_i32 = arith.constant 0 : i32
    %c0_i32_0 = arith.constant 0 : i32
    return %arg0, %c0_i32 : i32, i32
  }
  func.func @transform_1(%arg0: i32, %arg1: i32) -> (i32, i32) {
    %c0_i32 = arith.constant 0 : i32
    %c0_i32_0 = arith.constant 0 : i32
    return %c0_i32, %arg1 : i32, i32
  }
  func.func @transform_2(%arg0: i32, %arg1: i32) -> (i32, i32) {
    %c0_i32 = arith.constant 0 : i32
    %c0_i32_0 = arith.constant 0 : i32
    return %c0_i32, %arg1 : i32, i32
  }
  func.func @transform_3(%arg0: i32, %arg1: i32) -> (i32, i32) {
    %c0_i32 = arith.constant 0 : i32
    return %arg0, %arg1 : i32, i32
  }
}

</mosaic_0001>

<llo_original>
// kernel: mhsa_forward.5
$region0: #{mhsa_forward.5}
  #allocation0 [shape = 'u32[]', space=smem, size = 0x4, offset = 0x4, fixed_abs, tag = 'smem constant byte address 0x4 - core index']
  #allocation1 [shape = 'u32[144,128]{1,0:T(1,128)}', space=vmem, size = 0x12000, scoped, tag = 'internal scratch']
  %s0 = inlined_call_operand.vmem [shape: f32[2,8,32], index: 0, kind: input, shape index: {}]
  %s1 = inlined_call_operand.vmem [shape: f32[1,1,32], index: 1, kind: input, shape index: {}]
  %s2 = inlined_call_operand.vmem [shape: f32[1,1,32], index: 2, kind: input, shape index: {}]
  %s3 = inlined_call_operand.vmem [shape: bf16[2,8,32], index: 3, kind: output, shape index: {}]
  %s4 = sld [smem:[#allocation0]]
  $region45: #{mhsa_forward.5} parent=0
    _
  %s6 = ssub.s32 1, %s4
  %s7 = scalar_select 0, %s6, %s4
  loop: start=0, step=1, limit=4
  $region2: #{mhsa_forward.5} parent=0 // loop_pre_header
    _
  $region3: #{mhsa_forward.5} parent=0 // loop_header
    %s9 = sphi 0, %s13
    %p10 = scmp.ge.s32.totalorder %s9, 4
    %s19 = sphi 0, %s21
    %s22 = sphi 0, %s19
    %s23 = sphi 0, %s22
    %s39 = sphi 0, %s23
    %s43 = sphi 0, %s43
    %s45 = sphi 0, %s43
    %s46 = sphi 0, %s45
    %s60 = sphi 0, %s46
    %s64 = sphi 0, %s64
    %s66 = sphi 0, %s64
    %s67 = sphi 0, %s66
    %s81 = sphi 0, %s67
    %s87 = sphi 0, %s89
    %s90 = sphi 0, %s87
    %s91 = sphi 0, %s90
    %s107 = sphi 0, %s91
  $region4: #{mhsa_forward.5} parent=0 // loop_header_branch
    %12 = sbr.rel (%p10) target = $region8
  $region5: #{mhsa_forward.5} parent=0 // loop_body
    %s14 = ssub.s32 %s9, 1
    %s15 = ssub.s32 %s9, 2
    %s16 = sadd.s32 %s9, 1
    %s17 = ssub.s32 %s9, %s16
    %p18 = scmp.eq.s32.totalorder %s17, 0
    %s20 = sadd.s32 %s19, 1
    %s21 = scalar_select %p18, %s19, %s20
    %p24 = pneg %p18
    %p25 = scmp.eq.s32.totalorder %s9, 1
    %p26 = por %p24, %p25
    %p27 = scmp.ne.s32.totalorder %s19, %s22
    %p28 = scmp.eq.s32.totalorder %s9, 0
    %p29 = por %p27, %p28
    %p30 = scmp.ne.s32.totalorder %s19, %s22
    %p31 = scmp.eq.s32.totalorder %s14, 1
    %p32 = por %p30, %p31
    %p33 = scmp.ne.s32.totalorder %s22, %s23
    %p34 = scmp.eq.s32.totalorder %s14, 0
    %p35 = por %p33, %p34
    %p36 = scmp.ne.s32.totalorder %s22, %s23
    %p37 = scmp.eq.s32.totalorder %s15, 1
    %p38 = por %p36, %p37
    %p40 = scmp.ne.s32.totalorder %s23, %s39
    %p41 = scmp.eq.s32.totalorder %s15, 0
    %p42 = por %p40, %p41
    %s44 = sadd.s32 %s43, 1
    %p47 = scmp.eq.s32.totalorder %s9, 1
    %p48 = scmp.ne.s32.totalorder %s43, %s45
    %p49 = scmp.eq.s32.totalorder %s9, 0
    %p50 = por %p48, %p49
    %p51 = scmp.ne.s32.totalorder %s43, %s45
    %p52 = scmp.eq.s32.totalorder %s14, 1
    %p53 = por %p51, %p52
    %p54 = scmp.ne.s32.totalorder %s45, %s46
    %p55 = scmp.eq.s32.totalorder %s14, 0
    %p56 = por %p54, %p55
    %p57 = scmp.ne.s32.totalorder %s45, %s46
    %p58 = scmp.eq.s32.totalorder %s15, 1
    %p59 = por %p57, %p58
    %p61 = scmp.ne.s32.totalorder %s46, %s60
    %p62 = scmp.eq.s32.totalorder %s15, 0
    %p63 = por %p61, %p62
    %s65 = sadd.s32 %s64, 1
    %p68 = scmp.eq.s32.totalorder %s9, 1
    %p69 = scmp.ne.s32.totalorder %s64, %s66
    %p70 = scmp.eq.s32.totalorder %s9, 0
    %p71 = por %p69, %p70
    %p72 = scmp.ne.s32.totalorder %s64, %s66
    %p73 = scmp.eq.s32.totalorder %s14, 1
    %p74 = por %p72, %p73
    %p75 = scmp.ne.s32.totalorder %s66, %s67
    %p76 = scmp.eq.s32.totalorder %s14, 0
    %p77 = por %p75, %p76
    %p78 = scmp.ne.s32.totalorder %s66, %s67
    %p79 = scmp.eq.s32.totalorder %s15, 1
    %p80 = por %p78, %p79
    %p82 = scmp.ne.s32.totalorder %s67, %s81
    %p83 = scmp.eq.s32.totalorder %s15, 0
    %p84 = por %p82, %p83
    %s85 = ssub.s32 %s9, %s16
    %p86 = scmp.eq.s32.totalorder %s85, 0
    %s88 = sadd.s32 %s87, 1
    %s89 = scalar_select %p86, %s87, %s88
    %p92 = pneg %p86
    %p93 = scmp.eq.s32.totalorder %s9, 1
    %p94 = por %p92, %p93
    %p95 = scmp.ne.s32.totalorder %s87, %s90
    %p96 = scmp.eq.s32.totalorder %s9, 0
    %p97 = por %p95, %p96
    %p98 = scmp.ne.s32.totalorder %s87, %s90
    %p99 = scmp.eq.s32.totalorder %s14, 1
    %p100 = por %p98, %p99
    %p101 = scmp.ne.s32.totalorder %s90, %s91
    %p102 = scmp.eq.s32.totalorder %s14, 0
    %p103 = por %p101, %p102
    %p104 = scmp.ne.s32.totalorder %s90, %s91
    %p105 = scmp.eq.s32.totalorder %s15, 1
    %p106 = por %p104, %p105
    %p108 = scmp.ne.s32.totalorder %s91, %s107
    %p109 = scmp.eq.s32.totalorder %s15, 0
    %p110 = por %p108, %p109
    %p111 = scmp.le.s32.totalorder 1, %s9
    %p112 = scmp.lt.s32.totalorder %s9, 3
    %p113 = pnand %p111, %p112
    %p114 = pneg %p113
    // Predicated region
    $region9: #{mhsa_forward.5} parent=5 // pred_check
      _
    $region10: #{mhsa_forward.5} parent=5 // pred_check_branch
      %116 = sbr.rel (%p113) target = $region12
    $region11: #{mhsa_forward.5} parent=5 // pred_region
      %s117 = ssub.s32 %s9, 1
      // Predicated region
      $region13: #{mhsa_forward.5} parent=11 // pred_check
        %p118 = pneg %p56
      $region14: #{mhsa_forward.5} parent=11 // pred_check_branch
        %120 = sbr.rel (%p118) target = $region16
      $region15: #{mhsa_forward.5} parent=11 // pred_region
        _
      $region16: #{mhsa_forward.5} parent=11 // pred_fallthru
        _
      // Predicated region
      $region17: #{mhsa_forward.5} parent=11 // pred_check
        %p121 = pneg %p77
      $region18: #{mhsa_forward.5} parent=11 // pred_check_branch
        %123 = sbr.rel (%p121) target = $region20
      $region19: #{mhsa_forward.5} parent=11 // pred_region
        _
      $region20: #{mhsa_forward.5} parent=11 // pred_fallthru
        _
    $region12: #{mhsa_forward.5} parent=5 // pred_fallthru
      _
    %p124 = scmp.lt.s32.totalorder %s9, 2
    // Predicated region
    $region21: #{mhsa_forward.5} parent=5 // pred_check
      %p125 = pneg %p124
    $region22: #{mhsa_forward.5} parent=5 // pred_check_branch
      %127 = sbr.rel (%p125) target = $region24
    $region23: #{mhsa_forward.5} parent=5 // pred_region
      // Predicated region
      $region25: #{mhsa_forward.5} parent=23 // pred_check
        %p128 = pneg %p29
      $region26: #{mhsa_forward.5} parent=23 // pred_check_branch
        %130 = sbr.rel (%p128) target = $region28
      $region27: #{mhsa_forward.5} parent=23 // pred_region
        %p131 = scmp.lt.s32.totalorder %s9, 1
        %s132 = scalar_select %p131, %s9, 1
        %s133 = smul.addr %s132, 8
        %s134 = scalar_lea.vmem %s0, %s133
      $region28: #{mhsa_forward.5} parent=23 // pred_fallthru
        _
    $region24: #{mhsa_forward.5} parent=5 // pred_fallthru
      _
    %p135 = scmp.le.s32.totalorder 1, %s9
    %p136 = scmp.lt.s32.totalorder %s9, 3
    %p137 = pnand %p135, %p136
    %p138 = pneg %p137
    // Predicated region
    $region29: #{mhsa_forward.5} parent=5 // pred_check
      _
    $region30: #{mhsa_forward.5} parent=5 // pred_check_branch
      %140 = sbr.rel (%p137) target = $region32
    $region31: #{mhsa_forward.5} parent=5 // pred_region
      %s141 = ssub.s32 %s9, 1
      %p142 = scmp.lt.s32.totalorder %s14, 1
      %s143 = scalar_select %p142, %s14, 1
      %s144 = smul.addr %s143, 8
      %s145 = scalar_lea.vmem %s0, %s144
      %p146 = pneg %p35
      %p147 = pneg %p32
      %p148 = pneg %p56
      %p149 = pneg %p53
      %p150 = pneg %p77
      %p151 = pneg %p74
      %p152 = pneg %p103
      %p153 = pneg %p100
      %p154 = scmp.lt.s32.totalorder %s14, 1
      %s155 = scalar_select %p154, %s14, 1
      %s156 = smul.addr %s155, 4
      %s157 = scalar_lea.vmem %s3, %s156
      %p158 = scmp.lt.s32.totalorder %s14, 1
      %s159 = scalar_select %p158, %s14, 1
      %s160 = smul.addr %s159, 8
      %s161 = scalar_lea.vmem %s0, %s160
      %p162 = scmp.lt.s32.totalorder %s14, 1
      %s163 = scalar_select %p162, %s14, 1
      %s164 = smul.addr %s163, 4
      %s165 = scalar_lea.vmem %s3, %s164
      %v166 = vld [vmem:[%s161] sm:$0xff]
      %vm167 = vcmask 261120
      %v168 = vsel %vm167, %v166, 0.0
      %169 = vadd.xlane.f32.xlu0 %v168
      %v170 = vpop.xlane.xlu0 %169
      %v171 = vrot.slane %v170, 4
      %v172 = vadd.f32 %v170, %v171
      %v173 = vrot.slane %v172, 2
      %v174 = vadd.f32 %v172, %v173
      %v175 = vrot.slane %v174, 1
      %v176 = vadd.f32 %v174, %v175
      %v177 = vrcp.pop 256.0
      %v178 = vmul.f32 %v176, %v177
      %v179 = vmul.f32 %v166, %v166
      %v180 = vsel %vm167, %v179, 0.0
      %181 = vadd.xlane.f32.xlu0 %v180
      %v182 = vpop.xlane.xlu0 %181
      %v183 = vrot.slane %v182, 4
      %v184 = vadd.f32 %v182, %v183
      %v185 = vrot.slane %v184, 2
      %v186 = vadd.f32 %v184, %v185
      %v187 = vrot.slane %v186, 1
      %v188 = vadd.f32 %v186, %v187
      %v189 = vmul.f32 %v188, %v177
      %v190 = vmul.f32 %v178, %v178
      %v191 = vsub.f32 %v189, %v190
      %v192 = vsub.f32 %v166, %v178
      %v193 = vld [vmem:[%s1] sm:$0x1]
      %v195 = vlaneseq
      %v196 = vshrl.u32 %v195, 7
      %v197 = vsub.s32 0, %v196
      %v198 = vrot.slane %v193, %v197
      %v200 = vmul.f32 %v198, %v192
      %v201 = vadd.f32 %v191, 1e-08
      %v202 = vrsqrt.pop %v201
      %v203 = vmul.f32 %v200, %v202
      %v204 = vld [vmem:[%s2] sm:$0x1]
      %v206 = vlaneseq
      %v207 = vshrl.u32 %v206, 7
      %v208 = vsub.s32 0, %v207
      %v209 = vrot.slane %v204, %v208
      %v211 = vadd.f32 %v203, %v209
      %v212 = vpack.c.bf16 %v211, %v211
      %vm213 = vcmask 257024
      %214 = vst.msk [vmem:[%s165] sm:$0xf] %vm213, %v212
      %p215 = scmp.lt.s32.totalorder %s14, 1
      %s216 = scalar_select %p215, %s14, 1
      %s217 = smul.addr %s216, 4
      %s218 = scalar_lea.vmem %s3, %s217
      // Predicated region
      $region33: #{mhsa_forward.5} parent=31 // pred_check
        %p219 = pneg %p100
      $region34: #{mhsa_forward.5} parent=31 // pred_check_branch
        %221 = sbr.rel (%p219) target = $region36
      $region35: #{mhsa_forward.5} parent=31 // pred_region
        _
      $region36: #{mhsa_forward.5} parent=31 // pred_fallthru
        _
    $region32: #{mhsa_forward.5} parent=5 // pred_fallthru
      _
    %p222 = scmp.le.s32.totalorder 2, %s9
    // Predicated region
    $region37: #{mhsa_forward.5} parent=5 // pred_check
      %p223 = pneg %p222
    $region38: #{mhsa_forward.5} parent=5 // pred_check_branch
      %225 = sbr.rel (%p223) target = $region40
    $region39: #{mhsa_forward.5} parent=5 // pred_region
      %s226 = ssub.s32 %s9, 2
      // Predicated region
      $region41: #{mhsa_forward.5} parent=39 // pred_check
        %p227 = pneg %p106
      $region42: #{mhsa_forward.5} parent=39 // pred_check_branch
        %229 = sbr.rel (%p227) target = $region44
      $region43: #{mhsa_forward.5} parent=39 // pred_region
        %p230 = scmp.lt.s32.totalorder %s15, 1
        %s231 = scalar_select %p230, %s15, 1
        %s232 = smul.addr %s231, 4
        %s233 = scalar_lea.vmem %s3, %s232
      $region44: #{mhsa_forward.5} parent=39 // pred_fallthru
        _
    $region40: #{mhsa_forward.5} parent=5 // pred_fallthru
      _
  $region6: #{mhsa_forward.5} parent=0 // loop_footer
    %s13 = sadd.s32 1, %s9
  $region7: #{mhsa_forward.5} parent=0 // loop_footer_branch
    %8 = sbr.rel target = $region3
  $region8: #{mhsa_forward.5} parent=0 // loop_exit
    _

// kernel: mhsa_forward.6
$region0: #{mhsa_forward.6}
  #allocation0 [shape = 'u32[]', space=smem, size = 0x4, offset = 0x4, fixed_abs, tag = 'smem constant byte address 0x4 - core index']
  #allocation1 [shape = 'u32[144,128]{1,0:T(1,128)}', space=vmem, size = 0x12000, scoped, tag = 'internal scratch']
  %s0 = inlined_call_operand.vmem [shape: bf16[16,32], index: 0, kind: input, shape index: {}]
  %s1 = inlined_call_operand.vmem [shape: bf16[32,96], index: 1, kind: input, shape index: {}]
  %s2 = inlined_call_operand.vmem [shape: f32[1,96], index: 2, kind: input, shape index: {}]
  %s3 = inlined_call_operand.vmem [shape: bf16[16,96], index: 3, kind: output, shape index: {}]
  %s4 = sld [smem:[#allocation0]]
  $region22: #{mhsa_forward.6} parent=0
    _
  %s6 = ssub.s32 1, %s4
  %s7 = scalar_select 0, %s6, %s4
  // Predicated region
  $region2: #{mhsa_forward.6} parent=0 // pred_check
    _
  $region3: #{mhsa_forward.6} parent=0 // pred_check_branch
    %9 = sbr.rel (0) target = $region5
  $region4: #{mhsa_forward.6} parent=0 // pred_region
    _
  $region5: #{mhsa_forward.6} parent=0 // pred_fallthru
    _
  // Predicated region
  $region6: #{mhsa_forward.6} parent=0 // pred_check
    _
  $region7: #{mhsa_forward.6} parent=0 // pred_check_branch
    %11 = sbr.rel (0) target = $region9
  $region8: #{mhsa_forward.6} parent=0 // pred_region
    _
  $region9: #{mhsa_forward.6} parent=0 // pred_fallthru
    _
  // Predicated region
  $region10: #{mhsa_forward.6} parent=0 // pred_check
    _
  $region11: #{mhsa_forward.6} parent=0 // pred_check_branch
    %13 = sbr.rel (0) target = $region13
  $region12: #{mhsa_forward.6} parent=0 // pred_region
    _
  $region13: #{mhsa_forward.6} parent=0 // pred_fallthru
    _
  %v15 = vld [vmem:[%s0] sm:$0xf]
  %v16 = vld [vmem:[%s0 + $0x4] sm:$0xf]
  %v17 = vld [vmem:[%s1] sm:$0xf]
  %v18 = vld [vmem:[%s1 + $0x4] sm:$0xf]
  %v19 = vld [vmem:[%s1 + $0x8] sm:$0xf]
  %v20 = vld [vmem:[%s1 + $0xc] sm:$0xf]
  %v21 = vld [vmem:[%s2] sm:$0x1]
  %v23 = vlaneseq
  %v24 = vshrl.u32 %v23, 7
  %v25 = vsub.s32 0, %v24
  %v26 = vrot.slane %v21, %v25
  %v30 = vunpack.c.l.b16 %v15
  %v31 = vunpack.c.l.b16 %v16
  %v32 = vpack.c.b16 %v31, %v30
  %v37 = vunpack.c.l.b16 %v17
  %v38 = vunpack.c.l.b16 %v18
  %v39 = vunpack.c.l.b16 %v19
  %v40 = vunpack.c.l.b16 %v20
  %v41 = vpack.c.b16 %v38, %v37
  %v42 = vpack.c.b16 %v40, %v39
  %vm45 = vcmask 261120
  %v47 = vsel %vm45, %v32, 0
  %49 = vmatprep.subr.bf16.mxu0 0
  %50 = vmatpush1.bf16.msra.mxu0 0
  %51 = vmatprep.subr.bf16.mxu0 0
  %52 = vmatpush1.bf16.msra.mxu0 0
  %53 = vmatprep.subr.bf16.mxu0 0
  %54 = vmatpush1.bf16.msra.mxu0 0
  %55 = vmatprep.subr.bf16.mxu0 0
  %56 = vmatpush1.bf16.msra.mxu0 0
  %57 = vmatprep.subr.bf16.mxu0 0
  %58 = vmatpush1.bf16.msra.mxu0 0
  %59 = vmatprep.subr.bf16.mxu0 0
  %60 = vmatpush1.bf16.msra.mxu0 0
  %61 = vmatprep.subr.bf16.mxu0 0
  %62 = vmatpush1.bf16.msra.mxu0 %v42
  %63 = vmatprep.subr.bf16.mxu0 0
  %64 = vmatpush1.bf16.msra.mxu0 %v41
  %65 = vmatprep.subr.bf16.mxu0 0
  %66 = vmatpush2.bf16.msra.mxu0 0
  %67 = vmatprep.subr.bf16.mxu0 0
  %68 = vmatpush2.bf16.msra.mxu0 0
  %69 = vmatprep.subr.bf16.mxu0 0
  %70 = vmatpush2.bf16.msra.mxu0 0
  %71 = vmatprep.subr.bf16.mxu0 0
  %72 = vmatpush2.bf16.msra.mxu0 0
  %73 = vmatprep.subr.bf16.mxu0 0
  %74 = vmatpush2.bf16.msra.mxu0 0
  %75 = vmatprep.subr.bf16.mxu0 0
  %76 = vmatpush2.bf16.msra.mxu0 0
  %77 = vmatprep.subr.bf16.mxu0 0
  %78 = vmatpush2.bf16.msra.mxu0 0
  %79 = vmatprep.subr.bf16.mxu0 0
  %80 = vmatpush2.bf16.msra.mxu0 0
  %81 = vmatprep.mubr.bf16.mxu0 0
  %82 = vmatmul.mubr.bf16.gmra.mxu0 %v47
  %v83 = vpop.f32.mrf.mxu0
  %v84 = vadd.f32 %v26, %v83
  %v85 = vpop.f32.mrf.mxu0
  %v86 = vpop.f32.mrf.mxu0
  %v87 = vadd.f32 %v26, %v86
  %v88 = vpop.f32.mrf.mxu0
  %89 = vdwg.mxu0
  %v90 = vpack.c.bf16 %v87, %v84
  %v92 = vunpack.c.l.b16 %v90
  %v93 = vunpack.c.h.b16 %v90
  %v94 = vpack.c.b16 %v92, %v92
  %v95 = vpack.c.b16 %v93, %v93
  %vm98 = vcmask 781312
  %99 = vst.msk [vmem:[%s3] sm:$0xf] %vm98, %v94
  %100 = vst.msk [vmem:[%s3 + $0x4] sm:$0xf] %vm98, %v95
  // Predicated region
  $region14: #{mhsa_forward.6} parent=0 // pred_check
    _
  $region15: #{mhsa_forward.6} parent=0 // pred_check_branch
    %102 = sbr.rel (0) target = $region17
  $region16: #{mhsa_forward.6} parent=0 // pred_region
    _
  $region17: #{mhsa_forward.6} parent=0 // pred_fallthru
    _
  // Predicated region
  $region18: #{mhsa_forward.6} parent=0 // pred_check
    _
  $region19: #{mhsa_forward.6} parent=0 // pred_check_branch
    %104 = sbr.rel (0) target = $region21
  $region20: #{mhsa_forward.6} parent=0 // pred_region
    _
  $region21: #{mhsa_forward.6} parent=0 // pred_fallthru
    _

// kernel: mhsa_forward.7
$region0: #{mhsa_forward.7}
  #allocation0 [shape = 'u32[]', space=smem, size = 0x4, offset = 0x4, fixed_abs, tag = 'smem constant byte address 0x4 - core index']
  #allocation1 [shape = 'u32[144,128]{1,0:T(1,128)}', space=vmem, size = 0x12000, scoped, tag = 'internal scratch']
  %s0 = inlined_call_operand.vmem [shape: bf16[8,32], index: 0, kind: input, shape index: {}]
  %s1 = inlined_call_operand.vmem [shape: bf16[32,32], index: 1, kind: input, shape index: {}]
  %s2 = inlined_call_operand.vmem [shape: f32[1,32], index: 2, kind: input, shape index: {}]
  %s3 = inlined_call_operand.vmem [shape: bf16[8,32], index: 3, kind: output, shape index: {}]
  %s4 = sld [smem:[#allocation0]]
  $region22: #{mhsa_forward.7} parent=0
    _
  %s6 = ssub.s32 1, %s4
  %s7 = scalar_select 0, %s6, %s4
  // Predicated region
  $region2: #{mhsa_forward.7} parent=0 // pred_check
    _
  $region3: #{mhsa_forward.7} parent=0 // pred_check_branch
    %9 = sbr.rel (0) target = $region5
  $region4: #{mhsa_forward.7} parent=0 // pred_region
    _
  $region5: #{mhsa_forward.7} parent=0 // pred_fallthru
    _
  // Predicated region
  $region6: #{mhsa_forward.7} parent=0 // pred_check
    _
  $region7: #{mhsa_forward.7} parent=0 // pred_check_branch
    %11 = sbr.rel (0) target = $region9
  $region8: #{mhsa_forward.7} parent=0 // pred_region
    _
  $region9: #{mhsa_forward.7} parent=0 // pred_fallthru
    _
  // Predicated region
  $region10: #{mhsa_forward.7} parent=0 // pred_check
    _
  $region11: #{mhsa_forward.7} parent=0 // pred_check_branch
    %13 = sbr.rel (0) target = $region13
  $region12: #{mhsa_forward.7} parent=0 // pred_region
    _
  $region13: #{mhsa_forward.7} parent=0 // pred_fallthru
    _
  %v15 = vld [vmem:[%s0] sm:$0xf]
  %v16 = vld [vmem:[%s1] sm:$0xf]
  %v17 = vld [vmem:[%s1 + $0x4] sm:$0xf]
  %v18 = vld [vmem:[%s1 + $0x8] sm:$0xf]
  %v19 = vld [vmem:[%s1 + $0xc] sm:$0xf]
  %v20 = vld [vmem:[%s2] sm:$0x1]
  %v22 = vlaneseq
  %v23 = vshrl.u32 %v22, 7
  %v24 = vsub.s32 0, %v23
  %v25 = vrot.slane %v20, %v24
  %v31 = vunpack.c.l.b16 %v16
  %v32 = vunpack.c.l.b16 %v17
  %v33 = vunpack.c.l.b16 %v18
  %v34 = vunpack.c.l.b16 %v19
  %v35 = vpack.c.b16 %v32, %v31
  %v36 = vpack.c.b16 %v34, %v33
  %vm39 = vcmask 261120
  %v41 = vsel %vm39, %v15, 0
  %43 = vmatprep.subr.bf16.mxu0 0
  %44 = vmatpush1.bf16.msra.mxu0 0
  %45 = vmatprep.subr.bf16.mxu0 0
  %46 = vmatpush1.bf16.msra.mxu0 0
  %47 = vmatprep.subr.bf16.mxu0 0
  %48 = vmatpush1.bf16.msra.mxu0 0
  %49 = vmatprep.subr.bf16.mxu0 0
  %50 = vmatpush1.bf16.msra.mxu0 0
  %51 = vmatprep.subr.bf16.mxu0 0
  %52 = vmatpush1.bf16.msra.mxu0 0
  %53 = vmatprep.subr.bf16.mxu0 0
  %54 = vmatpush1.bf16.msra.mxu0 0
  %55 = vmatprep.subr.bf16.mxu0 0
  %56 = vmatpush1.bf16.msra.mxu0 %v36
  %57 = vmatprep.subr.bf16.mxu0 0
  %58 = vmatpush1.bf16.msra.mxu0 %v35
  %59 = vmatprep.subr.bf16.mxu0 0
  %60 = vmatpush2.bf16.msra.mxu0 0
  %61 = vmatprep.subr.bf16.mxu0 0
  %62 = vmatpush2.bf16.msra.mxu0 0
  %63 = vmatprep.subr.bf16.mxu0 0
  %64 = vmatpush2.bf16.msra.mxu0 0
  %65 = vmatprep.subr.bf16.mxu0 0
  %66 = vmatpush2.bf16.msra.mxu0 0
  %67 = vmatprep.subr.bf16.mxu0 0
  %68 = vmatpush2.bf16.msra.mxu0 0
  %69 = vmatprep.subr.bf16.mxu0 0
  %70 = vmatpush2.bf16.msra.mxu0 0
  %71 = vmatprep.subr.bf16.mxu0 0
  %72 = vmatpush2.bf16.msra.mxu0 0
  %73 = vmatprep.subr.bf16.mxu0 0
  %74 = vmatpush2.bf16.msra.mxu0 0
  %75 = vmatprep.mubr.bf16.mxu0 0
  %76 = vmatmul.mubr.bf16.gmra.mxu0 %v41
  %v77 = vpop.f32.mrf.mxu0
  %v78 = vadd.f32 %v25, %v77
  %v79 = vpop.f32.mrf.mxu0
  %v80 = vpop.f32.mrf.mxu0
  %v81 = vpop.f32.mrf.mxu0
  %82 = vdwg.mxu0
  %v83 = vpack.c.bf16 %v78, %v78
  %vm84 = vcmask 257024
  %85 = vst.msk [vmem:[%s3] sm:$0xf] %vm84, %v83
  // Predicated region
  $region14: #{mhsa_forward.7} parent=0 // pred_check
    _
  $region15: #{mhsa_forward.7} parent=0 // pred_check_branch
    %87 = sbr.rel (0) target = $region17
  $region16: #{mhsa_forward.7} parent=0 // pred_region
    _
  $region17: #{mhsa_forward.7} parent=0 // pred_fallthru
    _
  // Predicated region
  $region18: #{mhsa_forward.7} parent=0 // pred_check
    _
  $region19: #{mhsa_forward.7} parent=0 // pred_check_branch
    %89 = sbr.rel (0) target = $region21
  $region20: #{mhsa_forward.7} parent=0 // pred_region
    _
  $region21: #{mhsa_forward.7} parent=0 // pred_fallthru
    _

// kernel: mhsa_forward.9
$region0: #{mhsa_forward.9}
  #allocation0 [shape = 'u32[]', space=smem, size = 0x4, offset = 0x4, fixed_abs, tag = 'smem constant byte address 0x4 - core index']
  #allocation1 [shape = 'u32[144,128]{1,0:T(1,128)}', space=vmem, size = 0x12000, scoped, tag = 'internal scratch']
  %s0 = inlined_call_operand.vmem [shape: bf16[16,32], index: 0, kind: input, shape index: {}]
  %s1 = inlined_call_operand.vmem [shape: bf16[32,32], index: 1, kind: input, shape index: {}]
  %s2 = inlined_call_operand.vmem [shape: f32[1,32], index: 2, kind: input, shape index: {}]
  %s3 = inlined_call_operand.hbm [shape: f32[16,32], index: 3, kind: output, shape index: {}]
  %s4 = sld [smem:[#allocation0]]
  $region22: #{mhsa_forward.9} parent=0
    _
  %s6 = ssub.s32 1, %s4
  %s7 = scalar_select 0, %s6, %s4
  $region1: #{mhsa_forward.9} parent=0
    #allocation2 [shape = 'u8[8192]{0}', space=vmem, size = 0x2000, scoped, tag = 'output window, operand 0, single buffered']
    #allocation3 [shape = 's32[1]{0}', space=sflag, size = 0x4, scoped, tag = 'scoped memory for mhsa_forward.9']
    %8 = vsyncpa [#allocation3], 0
    // Predicated region
    $region2: #{mhsa_forward.9} parent=1 // pred_check
      _
    $region3: #{mhsa_forward.9} parent=1 // pred_check_branch
      %10 = sbr.rel (0) target = $region5
    $region4: #{mhsa_forward.9} parent=1 // pred_region
      _
    $region5: #{mhsa_forward.9} parent=1 // pred_fallthru
      _
    // Predicated region
    $region6: #{mhsa_forward.9} parent=1 // pred_check
      _
    $region7: #{mhsa_forward.9} parent=1 // pred_check_branch
      %12 = sbr.rel (0) target = $region9
    $region8: #{mhsa_forward.9} parent=1 // pred_region
      _
    $region9: #{mhsa_forward.9} parent=1 // pred_fallthru
      _
    // Predicated region
    $region10: #{mhsa_forward.9} parent=1 // pred_check
      _
    $region11: #{mhsa_forward.9} parent=1 // pred_check_branch
      %14 = sbr.rel (0) target = $region13
    $region12: #{mhsa_forward.9} parent=1 // pred_region
      _
    $region13: #{mhsa_forward.9} parent=1 // pred_fallthru
      _
    %v16 = vld [vmem:[%s0] sm:$0xf]
    %v17 = vld [vmem:[%s0 + $0x4] sm:$0xf]
    %v18 = vld [vmem:[%s1] sm:$0xf]
    %v19 = vld [vmem:[%s1 + $0x4] sm:$0xf]
    %v20 = vld [vmem:[%s1 + $0x8] sm:$0xf]
    %v21 = vld [vmem:[%s1 + $0xc] sm:$0xf]
    %v22 = vld [vmem:[%s2] sm:$0x1]
    %v24 = vlaneseq
    %v25 = vshrl.u32 %v24, 7
    %v26 = vsub.s32 0, %v25
    %v27 = vrot.slane %v22, %v26
    %v31 = vunpack.c.l.b16 %v16
    %v32 = vunpack.c.l.b16 %v17
    %v33 = vpack.c.b16 %v32, %v31
    %v38 = vunpack.c.l.b16 %v18
    %v39 = vunpack.c.l.b16 %v19
    %v40 = vunpack.c.l.b16 %v20
    %v41 = vunpack.c.l.b16 %v21
    %v42 = vpack.c.b16 %v39, %v38
    %v43 = vpack.c.b16 %v41, %v40
    %vm46 = vcmask 261120
    %v48 = vsel %vm46, %v33, 0
    %50 = vmatprep.subr.bf16.mxu0 0
    %51 = vmatpush1.bf16.msra.mxu0 0
    %52 = vmatprep.subr.bf16.mxu0 0
    %53 = vmatpush1.bf16.msra.mxu0 0
    %54 = vmatprep.subr.bf16.mxu0 0
    %55 = vmatpush1.bf16.msra.mxu0 0
    %56 = vmatprep.subr.bf16.mxu0 0
    %57 = vmatpush1.bf16.msra.mxu0 0
    %58 = vmatprep.subr.bf16.mxu0 0
    %59 = vmatpush1.bf16.msra.mxu0 0
    %60 = vmatprep.subr.bf16.mxu0 0
    %61 = vmatpush1.bf16.msra.mxu0 0
    %62 = vmatprep.subr.bf16.mxu0 0
    %63 = vmatpush1.bf16.msra.mxu0 %v43
    %64 = vmatprep.subr.bf16.mxu0 0
    %65 = vmatpush1.bf16.msra.mxu0 %v42
    %66 = vmatprep.subr.bf16.mxu0 0
    %67 = vmatpush2.bf16.msra.mxu0 0
    %68 = vmatprep.subr.bf16.mxu0 0
    %69 = vmatpush2.bf16.msra.mxu0 0
    %70 = vmatprep.subr.bf16.mxu0 0
    %71 = vmatpush2.bf16.msra.mxu0 0
    %72 = vmatprep.subr.bf16.mxu0 0
    %73 = vmatpush2.bf16.msra.mxu0 0
    %74 = vmatprep.subr.bf16.mxu0 0
    %75 = vmatpush2.bf16.msra.mxu0 0
    %76 = vmatprep.subr.bf16.mxu0 0
    %77 = vmatpush2.bf16.msra.mxu0 0
    %78 = vmatprep.subr.bf16.mxu0 0
    %79 = vmatpush2.bf16.msra.mxu0 0
    %80 = vmatprep.subr.bf16.mxu0 0
    %81 = vmatpush2.bf16.msra.mxu0 0
    %82 = vmatprep.mubr.bf16.mxu0 0
    %83 = vmatmul.mubr.bf16.gmra.mxu0 %v48
    %v84 = vpop.f32.mrf.mxu0
    %v85 = vadd.f32 %v27, %v84
    %v86 = vpop.f32.mrf.mxu0
    %v87 = vpop.f32.mrf.mxu0
    %v88 = vadd.f32 %v27, %v87
    %v89 = vpop.f32.mrf.mxu0
    %90 = vdwg.mxu0
    %91 = vst.msk [vmem:[#allocation2] sm:$0xff] %vm46, %v85
    %92 = vst.msk [vmem:[#allocation2 + $0x8] sm:$0xff] %vm46, %v88
    // Predicated region
    $region14: #{mhsa_forward.9} parent=1 // pred_check
      _
    $region15: #{mhsa_forward.9} parent=1 // pred_check_branch
      %94 = sbr.rel (0) target = $region17
    $region16: #{mhsa_forward.9} parent=1 // pred_region
      %s96 = ssub.s32 256, 256
      %97 = vsyncadd [#allocation3], %s96
      %s98 = sshll.u32 [#allocation2], 4
      %s99 = int_to_ptr.vmem [resolvable:$true] %s98
      %104 = dma.vmem_to_hbm [thread:$0]  %s99, 256, %s3, [#allocation3], 128, 128, 8
    $region17: #{mhsa_forward.9} parent=1 // pred_fallthru
      _
    // Predicated region
    $region18: #{mhsa_forward.9} parent=1 // pred_check
      _
    $region19: #{mhsa_forward.9} parent=1 // pred_check_branch
      %106 = sbr.rel (0) target = $region21
    $region20: #{mhsa_forward.9} parent=1 // pred_region
      %107 = dma.done [#allocation3], 256
    $region21: #{mhsa_forward.9} parent=1 // pred_fallthru
      _
    %108 = vsyncpa [#allocation3], 1

// kernel: mhsa_forward.8
$region0: #{mhsa_forward.8}
  #allocation0 [shape = 'u32[]', space=smem, size = 0x4, offset = 0x4, fixed_abs, tag = 'smem constant byte address 0x4 - core index']
  #allocation1 [shape = 'u32[144,128]{1,0:T(1,128)}', space=vmem, size = 0x12000, scoped, tag = 'internal scratch']
  %s0 = inlined_call_operand.vmem [shape: bf16[2,4,8,8], index: 0, kind: input, shape index: {}]
  %s1 = inlined_call_operand.vmem [shape: bf16[2,4,8,8], index: 1, kind: input, shape index: {}]
  %s2 = inlined_call_operand.vmem [shape: bf16[2,4,8,8], index: 2, kind: input, shape index: {}]
  %s3 = inlined_call_operand.vmem [shape: bf16[4,8,8], index: 3, kind: input, shape index: {}]
  %s4 = inlined_call_operand.vmem [shape: f32[4,1,8], index: 4, kind: input, shape index: {}]
  %s5 = inlined_call_operand.vmem [shape: f32[4,1,8], index: 5, kind: input, shape index: {}]
  %s6 = inlined_call_operand.vmem [shape: bf16[2,4,8,8], index: 6, kind: output, shape index: {}]
  %s7 = sld [smem:[#allocation0]]
  $region57: #{mhsa_forward.8} parent=0
    _
  %s9 = ssub.s32 1, %s7
  %s10 = scalar_select 0, %s9, %s7
  loop: start=0, step=1, limit=10
  $region2: #{mhsa_forward.8} parent=0 // loop_pre_header
    _
  $region3: #{mhsa_forward.8} parent=0 // loop_header
    %s12 = sphi 0, %s16
    %p13 = scmp.ge.s32.totalorder %s12, 10
    %s19 = sphi 0, %s31
    %s20 = sphi 0, %s27
    %s21 = sphi 0, %s19
    %s22 = sphi 0, %s20
    %s23 = sphi 0, %s21
    %s24 = sphi 0, %s22
    %s36 = sphi 0, %s38
    %s39 = sphi 0, %s36
    %s40 = sphi 0, %s39
    %s56 = sphi 0, %s40
    %s64 = sphi 0, %s66
    %s67 = sphi 0, %s64
    %s68 = sphi 0, %s67
    %s84 = sphi 0, %s68
    %s92 = sphi 0, %s94
    %s95 = sphi 0, %s92
    %s96 = sphi 0, %s95
    %s112 = sphi 0, %s96
    %s118 = sphi 0, %s120
    %s121 = sphi 0, %s118
    %s122 = sphi 0, %s121
    %s138 = sphi 0, %s122
    %s144 = sphi 0, %s146
    %s147 = sphi 0, %s144
    %s148 = sphi 0, %s147
    %s164 = sphi 0, %s148
    %s170 = sphi 0, %s172
    %s173 = sphi 0, %s170
    %s174 = sphi 0, %s173
    %s190 = sphi 0, %s174
    %s198 = sphi 0, %s200
    %s201 = sphi 0, %s198
    %s202 = sphi 0, %s201
    %s218 = sphi 0, %s202
  $region4: #{mhsa_forward.8} parent=0 // loop_header_branch
    %15 = sbr.rel (%p13) target = $region8
  $region5: #{mhsa_forward.8} parent=0 // loop_body
    %s17 = ssub.s32 %s12, 1
    %s18 = ssub.s32 %s12, 2
    %s25 = sadd.s32 1, %s20
    %p26 = scmp.ge.s32.totalorder %s25, 4
    %s27 = scalar_select %p26, 0, %s25
    %s28 = sadd.s32 1, %s19
    %s29 = scalar_select %p26, %s28, %s19
    %p30 = scmp.ge.s32.totalorder %s29, 2
    %s31 = scalar_select %p30, 0, %s29
    %s32 = ssub.s32 %s19, %s31
    %s33 = ssub.s32 %s20, %s27
    %s34 = sor.u32 %s32, %s33
    %p35 = scmp.eq.s32.totalorder %s34, 0
    %s37 = sadd.s32 %s36, 1
    %s38 = scalar_select %p35, %s36, %s37
    %p41 = pneg %p35
    %p42 = scmp.eq.s32.totalorder %s12, 7
    %p43 = por %p41, %p42
    %p44 = scmp.ne.s32.totalorder %s36, %s39
    %p45 = scmp.eq.s32.totalorder %s12, 0
    %p46 = por %p44, %p45
    %p47 = scmp.ne.s32.totalorder %s36, %s39
    %p48 = scmp.eq.s32.totalorder %s17, 7
    %p49 = por %p47, %p48
    %p50 = scmp.ne.s32.totalorder %s39, %s40
    %p51 = scmp.eq.s32.totalorder %s17, 0
    %p52 = por %p50, %p51
    %p53 = scmp.ne.s32.totalorder %s39, %s40
    %p54 = scmp.eq.s32.totalorder %s18, 7
    %p55 = por %p53, %p54
    %p57 = scmp.ne.s32.totalorder %s40, %s56
    %p58 = scmp.eq.s32.totalorder %s18, 0
    %p59 = por %p57, %p58
    %s60 = ssub.s32 %s19, %s31
    %s61 = ssub.s32 %s20, %s27
    %s62 = sor.u32 %s60, %s61
    %p63 = scmp.eq.s32.totalorder %s62, 0
    %s65 = sadd.s32 %s64, 1
    %s66 = scalar_select %p63, %s64, %s65
    %p69 = pneg %p63
    %p70 = scmp.eq.s32.totalorder %s12, 7
    %p71 = por %p69, %p70
    %p72 = scmp.ne.s32.totalorder %s64, %s67
    %p73 = scmp.eq.s32.totalorder %s12, 0
    %p74 = por %p72, %p73
    %p75 = scmp.ne.s32.totalorder %s64, %s67
    %p76 = scmp.eq.s32.totalorder %s17, 7
    %p77 = por %p75, %p76
    %p78 = scmp.ne.s32.totalorder %s67, %s68
    %p79 = scmp.eq.s32.totalorder %s17, 0
    %p80 = por %p78, %p79
    %p81 = scmp.ne.s32.totalorder %s67, %s68
    %p82 = scmp.eq.s32.totalorder %s18, 7
    %p83 = por %p81, %p82
    %p85 = scmp.ne.s32.totalorder %s68, %s84
    %p86 = scmp.eq.s32.totalorder %s18, 0
    %p87 = por %p85, %p86
    %s88 = ssub.s32 %s19, %s31
    %s89 = ssub.s32 %s20, %s27
    %s90 = sor.u32 %s88, %s89
    %p91 = scmp.eq.s32.totalorder %s90, 0
    %s93 = sadd.s32 %s92, 1
    %s94 = scalar_select %p91, %s92, %s93
    %p97 = pneg %p91
    %p98 = scmp.eq.s32.totalorder %s12, 7
    %p99 = por %p97, %p98
    %p100 = scmp.ne.s32.totalorder %s92, %s95
    %p101 = scmp.eq.s32.totalorder %s12, 0
    %p102 = por %p100, %p101
    %p103 = scmp.ne.s32.totalorder %s92, %s95
    %p104 = scmp.eq.s32.totalorder %s17, 7
    %p105 = por %p103, %p104
    %p106 = scmp.ne.s32.totalorder %s95, %s96
    %p107 = scmp.eq.s32.totalorder %s17, 0
    %p108 = por %p106, %p107
    %p109 = scmp.ne.s32.totalorder %s95, %s96
    %p110 = scmp.eq.s32.totalorder %s18, 7
    %p111 = por %p109, %p110
    %p113 = scmp.ne.s32.totalorder %s96, %s112
    %p114 = scmp.eq.s32.totalorder %s18, 0
    %p115 = por %p113, %p114
    %s116 = ssub.s32 %s20, %s27
    %p117 = scmp.eq.s32.totalorder %s116, 0
    %s119 = sadd.s32 %s118, 1
    %s120 = scalar_select %p117, %s118, %s119
    %p123 = pneg %p117
    %p124 = scmp.eq.s32.totalorder %s12, 7
    %p125 = por %p123, %p124
    %p126 = scmp.ne.s32.totalorder %s118, %s121
    %p127 = scmp.eq.s32.totalorder %s12, 0
    %p128 = por %p126, %p127
    %p129 = scmp.ne.s32.totalorder %s118, %s121
    %p130 = scmp.eq.s32.totalorder %s17, 7
    %p131 = por %p129, %p130
    %p132 = scmp.ne.s32.totalorder %s121, %s122
    %p133 = scmp.eq.s32.totalorder %s17, 0
    %p134 = por %p132, %p133
    %p135 = scmp.ne.s32.totalorder %s121, %s122
    %p136 = scmp.eq.s32.totalorder %s18, 7
    %p137 = por %p135, %p136
    %p139 = scmp.ne.s32.totalorder %s122, %s138
    %p140 = scmp.eq.s32.totalorder %s18, 0
    %p141 = por %p139, %p140
    %s142 = ssub.s32 %s20, %s27
    %p143 = scmp.eq.s32.totalorder %s142, 0
    %s145 = sadd.s32 %s144, 1
    %s146 = scalar_select %p143, %s144, %s145
    %p149 = pneg %p143
    %p150 = scmp.eq.s32.totalorder %s12, 7
    %p151 = por %p149, %p150
    %p152 = scmp.ne.s32.totalorder %s144, %s147
    %p153 = scmp.eq.s32.totalorder %s12, 0
    %p154 = por %p152, %p153
    %p155 = scmp.ne.s32.totalorder %s144, %s147
    %p156 = scmp.eq.s32.totalorder %s17, 7
    %p157 = por %p155, %p156
    %p158 = scmp.ne.s32.totalorder %s147, %s148
    %p159 = scmp.eq.s32.totalorder %s17, 0
    %p160 = por %p158, %p159
    %p161 = scmp.ne.s32.totalorder %s147, %s148
    %p162 = scmp.eq.s32.totalorder %s18, 7
    %p163 = por %p161, %p162
    %p165 = scmp.ne.s32.totalorder %s148, %s164
    %p166 = scmp.eq.s32.totalorder %s18, 0
    %p167 = por %p165, %p166
    %s168 = ssub.s32 %s20, %s27
    %p169 = scmp.eq.s32.totalorder %s168, 0
    %s171 = sadd.s32 %s170, 1
    %s172 = scalar_select %p169, %s170, %s171
    %p175 = pneg %p169
    %p176 = scmp.eq.s32.totalorder %s12, 7
    %p177 = por %p175, %p176
    %p178 = scmp.ne.s32.totalorder %s170, %s173
    %p179 = scmp.eq.s32.totalorder %s12, 0
    %p180 = por %p178, %p179
    %p181 = scmp.ne.s32.totalorder %s170, %s173
    %p182 = scmp.eq.s32.totalorder %s17, 7
    %p183 = por %p181, %p182
    %p184 = scmp.ne.s32.totalorder %s173, %s174
    %p185 = scmp.eq.s32.totalorder %s17, 0
    %p186 = por %p184, %p185
    %p187 = scmp.ne.s32.totalorder %s173, %s174
    %p188 = scmp.eq.s32.totalorder %s18, 7
    %p189 = por %p187, %p188
    %p191 = scmp.ne.s32.totalorder %s174, %s190
    %p192 = scmp.eq.s32.totalorder %s18, 0
    %p193 = por %p191, %p192
    %s194 = ssub.s32 %s19, %s31
    %s195 = ssub.s32 %s20, %s27
    %s196 = sor.u32 %s194, %s195
    %p197 = scmp.eq.s32.totalorder %s196, 0
    %s199 = sadd.s32 %s198, 1
    %s200 = scalar_select %p197, %s198, %s199
    %p203 = pneg %p197
    %p204 = scmp.eq.s32.totalorder %s12, 7
    %p205 = por %p203, %p204
    %p206 = scmp.ne.s32.totalorder %s198, %s201
    %p207 = scmp.eq.s32.totalorder %s12, 0
    %p208 = por %p206, %p207
    %p209 = scmp.ne.s32.totalorder %s198, %s201
    %p210 = scmp.eq.s32.totalorder %s17, 7
    %p211 = por %p209, %p210
    %p212 = scmp.ne.s32.totalorder %s201, %s202
    %p213 = scmp.eq.s32.totalorder %s17, 0
    %p214 = por %p212, %p213
    %p215 = scmp.ne.s32.totalorder %s201, %s202
    %p216 = scmp.eq.s32.totalorder %s18, 7
    %p217 = por %p215, %p216
    %p219 = scmp.ne.s32.totalorder %s202, %s218
    %p220 = scmp.eq.s32.totalorder %s18, 0
    %p221 = por %p219, %p220
    %p222 = scmp.le.s32.totalorder 1, %s12
    %p223 = scmp.lt.s32.totalorder %s12, 9
    %p224 = pnand %p222, %p223
    %p225 = pneg %p224
    // Predicated region
    $region9: #{mhsa_forward.8} parent=5 // pred_check
      _
    $region10: #{mhsa_forward.8} parent=5 // pred_check_branch
      %227 = sbr.rel (%p224) target = $region12
    $region11: #{mhsa_forward.8} parent=5 // pred_region
      %s228 = ssub.s32 %s12, 1
    $region12: #{mhsa_forward.8} parent=5 // pred_fallthru
      _
    %p229 = scmp.lt.s32.totalorder %s12, 8
    // Predicated region
    $region13: #{mhsa_forward.8} parent=5 // pred_check
      %p230 = pneg %p229
    $region14: #{mhsa_forward.8} parent=5 // pred_check_branch
      %232 = sbr.rel (%p230) target = $region16
    $region15: #{mhsa_forward.8} parent=5 // pred_region
      // Predicated region
      $region17: #{mhsa_forward.8} parent=15 // pred_check
        %p233 = pneg %p46
      $region18: #{mhsa_forward.8} parent=15 // pred_check_branch
        %235 = sbr.rel (%p233) target = $region20
      $region19: #{mhsa_forward.8} parent=15 // pred_region
        %p236 = scmp.lt.s32.totalorder %s19, 1
        %s237 = scalar_select %p236, %s19, 1
        %p238 = scmp.lt.s32.totalorder %s20, 3
        %s239 = scalar_select %p238, %s20, 3
        %s240 = smul.addr %s237, 4
        %s241 = sadd.s32 %s239, %s240
        %s242 = smul.addr %s241, 4
        %s243 = scalar_lea.vmem %s0, %s242
      $region20: #{mhsa_forward.8} parent=15 // pred_fallthru
        _
      // Predicated region
      $region21: #{mhsa_forward.8} parent=15 // pred_check
        %p244 = pneg %p74
      $region22: #{mhsa_forward.8} parent=15 // pred_check_branch
        %246 = sbr.rel (%p244) target = $region24
      $region23: #{mhsa_forward.8} parent=15 // pred_region
        %p247 = scmp.lt.s32.totalorder %s19, 1
        %s248 = scalar_select %p247, %s19, 1
        %p249 = scmp.lt.s32.totalorder %s20, 3
        %s250 = scalar_select %p249, %s20, 3
        %s251 = smul.addr %s248, 4
        %s252 = sadd.s32 %s250, %s251
        %s253 = smul.addr %s252, 4
        %s254 = scalar_lea.vmem %s1, %s253
      $region24: #{mhsa_forward.8} parent=15 // pred_fallthru
        _
      // Predicated region
      $region25: #{mhsa_forward.8} parent=15 // pred_check
        %p255 = pneg %p102
      $region26: #{mhsa_forward.8} parent=15 // pred_check_branch
        %257 = sbr.rel (%p255) target = $region28
      $region27: #{mhsa_forward.8} parent=15 // pred_region
        %p258 = scmp.lt.s32.totalorder %s19, 1
        %s259 = scalar_select %p258, %s19, 1
        %p260 = scmp.lt.s32.totalorder %s20, 3
        %s261 = scalar_select %p260, %s20, 3
        %s262 = smul.addr %s259, 4
        %s263 = sadd.s32 %s261, %s262
        %s264 = smul.addr %s263, 4
        %s265 = scalar_lea.vmem %s2, %s264
      $region28: #{mhsa_forward.8} parent=15 // pred_fallthru
        _
      // Predicated region
      $region29: #{mhsa_forward.8} parent=15 // pred_check
        %p266 = pneg %p128
      $region30: #{mhsa_forward.8} parent=15 // pred_check_branch
        %268 = sbr.rel (%p266) target = $region32
      $region31: #{mhsa_forward.8} parent=15 // pred_region
        %p269 = scmp.lt.s32.totalorder %s20, 3
        %s270 = scalar_select %p269, %s20, 3
        %s271 = smul.addr %s270, 4
        %s272 = scalar_lea.vmem %s3, %s271
      $region32: #{mhsa_forward.8} parent=15 // pred_fallthru
        _
      // Predicated region
      $region33: #{mhsa_forward.8} parent=15 // pred_check
        %p273 = pneg %p154
      $region34: #{mhsa_forward.8} parent=15 // pred_check_branch
        %275 = sbr.rel (%p273) target = $region36
      $region35: #{mhsa_forward.8} parent=15 // pred_region
        %p276 = scmp.lt.s32.totalorder %s20, 3
        %s277 = scalar_select %p276, %s20, 3
        %s278 = scalar_lea.vmem %s4, %s277
      $region36: #{mhsa_forward.8} parent=15 // pred_fallthru
        _
      // Predicated region
      $region37: #{mhsa_forward.8} parent=15 // pred_check
        %p279 = pneg %p180
      $region38: #{mhsa_forward.8} parent=15 // pred_check_branch
        %281 = sbr.rel (%p279) target = $region40
      $region39: #{mhsa_forward.8} parent=15 // pred_region
        %p282 = scmp.lt.s32.totalorder %s20, 3
        %s283 = scalar_select %p282, %s20, 3
        %s284 = scalar_lea.vmem %s5, %s283
      $region40: #{mhsa_forward.8} parent=15 // pred_fallthru
        _
    $region16: #{mhsa_forward.8} parent=5 // pred_fallthru
      _
    %p285 = scmp.le.s32.totalorder 1, %s12
    %p286 = scmp.lt.s32.totalorder %s12, 9
    %p287 = pnand %p285, %p286
    %p288 = pneg %p287
    // Predicated region
    $region41: #{mhsa_forward.8} parent=5 // pred_check
      _
    $region42: #{mhsa_forward.8} parent=5 // pred_check_branch
      %290 = sbr.rel (%p287) target = $region44
    $region43: #{mhsa_forward.8} parent=5 // pred_region
      %s291 = ssub.s32 %s12, 1
      %p292 = scmp.lt.s32.totalorder %s21, 1
      %s293 = scalar_select %p292, %s21, 1
      %p294 = scmp.lt.s32.totalorder %s22, 3
      %s295 = scalar_select %p294, %s22, 3
      %s296 = smul.addr %s293, 4
      %s297 = sadd.s32 %s295, %s296
      %s298 = smul.addr %s297, 4
      %s299 = scalar_lea.vmem %s0, %s298
      %p300 = pneg %p52
      %p301 = pneg %p49
      %p302 = scmp.lt.s32.totalorder %s21, 1
      %s303 = scalar_select %p302, %s21, 1
      %p304 = scmp.lt.s32.totalorder %s22, 3
      %s305 = scalar_select %p304, %s22, 3
      %s306 = smul.addr %s303, 4
      %s307 = sadd.s32 %s305, %s306
      %s308 = smul.addr %s307, 4
      %s309 = scalar_lea.vmem %s1, %s308
      %p310 = pneg %p80
      %p311 = pneg %p77
      %p312 = scmp.lt.s32.totalorder %s21, 1
      %s313 = scalar_select %p312, %s21, 1
      %p314 = scmp.lt.s32.totalorder %s22, 3
      %s315 = scalar_select %p314, %s22, 3
      %s316 = smul.addr %s313, 4
      %s317 = sadd.s32 %s315, %s316
      %s318 = smul.addr %s317, 4
      %s319 = scalar_lea.vmem %s2, %s318
      %p320 = pneg %p108
      %p321 = pneg %p105
      %p322 = scmp.lt.s32.totalorder %s22, 3
      %s323 = scalar_select %p322, %s22, 3
      %s324 = smul.addr %s323, 4
      %s325 = scalar_lea.vmem %s3, %s324
      %p326 = pneg %p134
      %p327 = pneg %p131
      %p328 = scmp.lt.s32.totalorder %s22, 3
      %s329 = scalar_select %p328, %s22, 3
      %s330 = scalar_lea.vmem %s4, %s329
      %p331 = pneg %p160
      %p332 = pneg %p157
      %p333 = scmp.lt.s32.totalorder %s22, 3
      %s334 = scalar_select %p333, %s22, 3
      %s335 = scalar_lea.vmem %s5, %s334
      %p336 = pneg %p186
      %p337 = pneg %p183
      %p338 = pneg %p214
      %p339 = pneg %p211
      %p340 = scmp.lt.s32.totalorder %s21, 1
      %s341 = scalar_select %p340, %s21, 1
      %p342 = scmp.lt.s32.totalorder %s22, 3
      %s343 = scalar_select %p342, %s22, 3
      %s344 = smul.addr %s341, 4
      %s345 = sadd.s32 %s343, %s344
      %s346 = smul.addr %s345, 4
      %s347 = scalar_lea.vmem %s6, %s346
      %p348 = scmp.lt.s32.totalorder %s21, 1
      %s349 = scalar_select %p348, %s21, 1
      %p350 = scmp.lt.s32.totalorder %s22, 3
      %s351 = scalar_select %p350, %s22, 3
      %s352 = smul.addr %s349, 4
      %s353 = sadd.s32 %s351, %s352
      %s354 = smul.addr %s353, 4
      %s355 = scalar_lea.vmem %s0, %s354
      %p356 = scmp.lt.s32.totalorder %s21, 1
      %s357 = scalar_select %p356, %s21, 1
      %p358 = scmp.lt.s32.totalorder %s22, 3
      %s359 = scalar_select %p358, %s22, 3
      %s360 = smul.addr %s357, 4
      %s361 = sadd.s32 %s359, %s360
      %s362 = smul.addr %s361, 4
      %s363 = scalar_lea.vmem %s1, %s362
      %p364 = scmp.lt.s32.totalorder %s21, 1
      %s365 = scalar_select %p364, %s21, 1
      %p366 = scmp.lt.s32.totalorder %s22, 3
      %s367 = scalar_select %p366, %s22, 3
      %s368 = smul.addr %s365, 4
      %s369 = sadd.s32 %s367, %s368
      %s370 = smul.addr %s369, 4
      %s371 = scalar_lea.vmem %s2, %s370
      %p372 = scmp.lt.s32.totalorder %s22, 3
      %s373 = scalar_select %p372, %s22, 3
      %s374 = smul.addr %s373, 4
      %s375 = scalar_lea.vmem %s3, %s374
      %p376 = scmp.lt.s32.totalorder %s22, 3
      %s377 = scalar_select %p376, %s22, 3
      %s378 = scalar_lea.vmem %s4, %s377
      %p379 = scmp.lt.s32.totalorder %s22, 3
      %s380 = scalar_select %p379, %s22, 3
      %s381 = scalar_lea.vmem %s5, %s380
      %p382 = scmp.lt.s32.totalorder %s21, 1
      %s383 = scalar_select %p382, %s21, 1
      %p384 = scmp.lt.s32.totalorder %s22, 3
      %s385 = scalar_select %p384, %s22, 3
      %s386 = smul.addr %s383, 4
      %s387 = sadd.s32 %s385, %s386
      %s388 = smul.addr %s387, 4
      %s389 = scalar_lea.vmem %s6, %s388
      %v391 = vld [vmem:[%s355] sm:$0xf]
      %v392 = vunpack.c.l.bf16 %v391
      %v393 = vld [vmem:[%s378] sm:$0x1]
      %v394 = vld [vmem:[%s381] sm:$0x1]
      %v396 = vlaneseq
      %v397 = vshrl.u32 %v396, 7
      %v398 = vsub.s32 0, %v397
      %v399 = vrot.slane %v393, %v398
      %v401 = vadd.f32 %v392, %v399
      %v402 = vmul.f32 %v401, 0.17677669
      %v403 = vpack.c.bf16 %v402, %v402
      %v405 = vlaneseq
      %v406 = vshrl.u32 %v405, 7
      %v407 = vsub.s32 0, %v406
      %v408 = vrot.slane %v394, %v407
      %v410 = vadd.f32 %v392, %v408
      %v411 = vmul.f32 %v410, 0.17677669
      %v412 = vpack.c.bf16 %v411, %v411
      %v413 = vld [vmem:[%s363] sm:$0xf]
      %v414 = vld [vmem:[%s371] sm:$0xf]
      %v415 = vld [vmem:[%s375] sm:$0xf]
      %vm416 = vcmask 64512
      %v418 = vsel %vm416, %v412, 0
      %v421 = vsel %vm416, %v415, 0
      %423 = vmatprep.subr.bf16.mxu0 0
      %424 = vmatpush1.bf16.xpose.msra.mxu0 0
      %425 = vmatprep.subr.bf16.mxu0 0
      %426 = vmatpush1.bf16.xpose.msra.mxu0 0
      %427 = vmatprep.subr.bf16.mxu0 0
      %428 = vmatpush1.bf16.xpose.msra.mxu0 0
      %429 = vmatprep.subr.bf16.mxu0 0
      %430 = vmatpush1.bf16.xpose.msra.mxu0 0
      %431 = vmatprep.subr.bf16.mxu0 0
      %432 = vmatpush1.bf16.xpose.msra.mxu0 0
      %433 = vmatprep.subr.bf16.mxu0 0
      %434 = vmatpush1.bf16.xpose.msra.mxu0 0
      %435 = vmatprep.subr.bf16.mxu0 0
      %436 = vmatpush1.bf16.xpose.msra.mxu0 0
      %437 = vmatprep.subr.bf16.mxu0 0
      %438 = vmatpush1.bf16.xpose.msra.mxu0 %v421
      %439 = vmatprep.subr.bf16.mxu0 0
      %440 = vmatpush2.bf16.xpose.msra.mxu0 0
      %441 = vmatprep.subr.bf16.mxu0 0
      %442 = vmatpush2.bf16.xpose.msra.mxu0 0
      %443 = vmatprep.subr.bf16.mxu0 0
      %444 = vmatpush2.bf16.xpose.msra.mxu0 0
      %445 = vmatprep.subr.bf16.mxu0 0
      %446 = vmatpush2.bf16.xpose.msra.mxu0 0
      %447 = vmatprep.subr.bf16.mxu0 0
      %448 = vmatpush2.bf16.xpose.msra.mxu0 0
      %449 = vmatprep.subr.bf16.mxu0 0
      %450 = vmatpush2.bf16.xpose.msra.mxu0 0
      %451 = vmatprep.subr.bf16.mxu0 0
      %452 = vmatpush2.bf16.xpose.msra.mxu0 0
      %453 = vmatprep.subr.bf16.mxu0 0
      %454 = vmatpush2.bf16.xpose.msra.mxu0 0
      %455 = vmatprep.mubr.bf16.mxu0 0
      %456 = vmatmul.mubr.bf16.gmra.mxu0 %v418
      %v457 = vpop.f32.mrf.mxu0
      %v458 = vadd.f32 0.0, %v457
      %v459 = vpop.f32.mrf.mxu0
      %v460 = vpop.f32.mrf.mxu0
      %v461 = vpop.f32.mrf.mxu0
      %462 = vdwg.mxu0
      %v463 = vlaneseq
      %v464 = vshrl.u32 %v463, 7
      %v465 = vlaneseq
      %v466 = vand.u32 %v465, 127
      %v467 = vadd.s32 %v464, 1
      %vm468 = vcmp.eq.s32.totalorder %v467, 8
      %v469 = vsel %vm468, 0, %v467
      %471 = vrot.lane.b32.xlu0 %v458, 121
      %v472 = vpop.permute.xlu0 %471
      %474 = vrot.lane.b32.xlu0 %v458, 1
      %v475 = vpop.permute.xlu0 %474
      %vm477 = vcmask 7168
      %v478 = vsel %vm477, %v472, %v475
      %v479 = vand.u32 %v469, 1
      %vm480 = vcmp.ne.s32.totalorder %v479, 0
      %v481 = vsel %vm480, %v478, %v458
      %483 = vrot.lane.b32.xlu0 %v481, 122
      %v484 = vpop.permute.xlu0 %483
      %486 = vrot.lane.b32.xlu0 %v481, 2
      %v487 = vpop.permute.xlu0 %486
      %vm489 = vcmask 15360
      %v490 = vsel %vm489, %v484, %v487
      %v491 = vand.u32 %v469, 2
      %vm492 = vcmp.ne.s32.totalorder %v491, 0
      %v493 = vsel %vm492, %v490, %v481
      %495 = vrot.lane.b32.xlu0 %v493, 124
      %v496 = vpop.permute.xlu0 %495
      %498 = vrot.lane.b32.xlu0 %v493, 4
      %v499 = vpop.permute.xlu0 %498
      %vm501 = vcmask 31744
      %v502 = vsel %vm501, %v496, %v499
      %v503 = vand.u32 %v469, 4
      %vm504 = vcmp.ne.s32.totalorder %v503, 0
      %v505 = vsel %vm504, %v502, %v493
      %v507 = vrot.slane %v505, 1
      %vm509 = vcmask 1046528
      %v510 = vsel %vm509, %v507, %v507
      %vm511 = vcmp.le.s32.totalorder %v466, %v464
      %v512 = vadd.s32 %v464, 2
      %vm513 = vcmp.ge.s32.totalorder %v466, %v512
      %v514 = vsel %vm513, %v510, 0.0
      %v515 = vsel %vm511, %v505, %v514
      %v517 = vsel %vm416, %v403, 0
      %v520 = vsel %vm416, %v413, 0
      %522 = vmatprep.subr.bf16.mxu0 0
      %523 = vmatpush1.bf16.xpose.msra.mxu0 0
      %524 = vmatprep.subr.bf16.mxu0 0
      %525 = vmatpush1.bf16.xpose.msra.mxu0 0
      %526 = vmatprep.subr.bf16.mxu0 0
      %527 = vmatpush1.bf16.xpose.msra.mxu0 0
      %528 = vmatprep.subr.bf16.mxu0 0
      %529 = vmatpush1.bf16.xpose.msra.mxu0 0
      %530 = vmatprep.subr.bf16.mxu0 0
      %531 = vmatpush1.bf16.xpose.msra.mxu0 0
      %532 = vmatprep.subr.bf16.mxu0 0
      %533 = vmatpush1.bf16.xpose.msra.mxu0 0
      %534 = vmatprep.subr.bf16.mxu0 0
      %535 = vmatpush1.bf16.xpose.msra.mxu0 0
      %536 = vmatprep.subr.bf16.mxu0 0
      %537 = vmatpush1.bf16.xpose.msra.mxu0 %v520
      %538 = vmatprep.subr.bf16.mxu0 0
      %539 = vmatpush2.bf16.xpose.msra.mxu0 0
      %540 = vmatprep.subr.bf16.mxu0 0
      %541 = vmatpush2.bf16.xpose.msra.mxu0 0
      %542 = vmatprep.subr.bf16.mxu0 0
      %543 = vmatpush2.bf16.xpose.msra.mxu0 0
      %544 = vmatprep.subr.bf16.mxu0 0
      %545 = vmatpush2.bf16.xpose.msra.mxu0 0
      %546 = vmatprep.subr.bf16.mxu0 0
      %547 = vmatpush2.bf16.xpose.msra.mxu0 0
      %548 = vmatprep.subr.bf16.mxu0 0
      %549 = vmatpush2.bf16.xpose.msra.mxu0 0
      %550 = vmatprep.subr.bf16.mxu0 0
      %551 = vmatpush2.bf16.xpose.msra.mxu0 0
      %552 = vmatprep.subr.bf16.mxu0 0
      %553 = vmatpush2.bf16.xpose.msra.mxu0 0
      %554 = vmatprep.mubr.bf16.mxu0 0
      %555 = vmatmul.mubr.bf16.gmra.mxu0 %v517
      %v556 = vpop.f32.mrf.mxu0
      %v557 = vadd.f32 %v515, %v556
      %v558 = vpop.f32.mrf.mxu0
      %v559 = vpop.f32.mrf.mxu0
      %v560 = vpop.f32.mrf.mxu0
      %561 = vdwg.mxu0
      %v562 = vsel %vm416, %v557, -inf
      %563 = vmax.xlane.f32.xlu0 %v562
      %v564 = vpop.xlane.xlu0 %563
      %v565 = vsub.f32 %v557, %v564
      %v566 = vmul.f32 %v565, 1.442695
      %v567 = vpow.pop %v566
      %v568 = vsel %vm416, %v567, 0.0
      %569 = vadd.xlane.f32.xlu0 %v568
      %v570 = vpop.xlane.xlu0 %569
      %v571 = vrcp.pop %v570
      %v572 = vmul.f32 %v567, %v571
      %v573 = vpack.c.bf16 %v572, %v572
      %v575 = vsel %vm416, %v573, 0
      %vm577 = vcmask 1043456
      %v579 = vsel %vm577, %v414, 0
      %581 = vmatprep.subr.bf16.mxu0 0
      %582 = vmatpush1.bf16.msra.mxu0 0
      %583 = vmatprep.subr.bf16.mxu0 0
      %584 = vmatpush1.bf16.msra.mxu0 0
      %585 = vmatprep.subr.bf16.mxu0 0
      %586 = vmatpush1.bf16.msra.mxu0 0
      %587 = vmatprep.subr.bf16.mxu0 0
      %588 = vmatpush1.bf16.msra.mxu0 0
      %589 = vmatprep.subr.bf16.mxu0 0
      %590 = vmatpush1.bf16.msra.mxu0 0
      %591 = vmatprep.subr.bf16.mxu0 0
      %592 = vmatpush1.bf16.msra.mxu0 0
      %593 = vmatprep.subr.bf16.mxu0 0
      %594 = vmatpush1.bf16.msra.mxu0 0
      %595 = vmatprep.subr.bf16.mxu0 0
      %596 = vmatpush1.bf16.msra.mxu0 %v579
      %597 = vmatprep.subr.bf16.mxu0 0
      %598 = vmatpush2.bf16.msra.mxu0 0
      %599 = vmatprep.subr.bf16.mxu0 0
      %600 = vmatpush2.bf16.msra.mxu0 0
      %601 = vmatprep.subr.bf16.mxu0 0
      %602 = vmatpush2.bf16.msra.mxu0 0
      %603 = vmatprep.subr.bf16.mxu0 0
      %604 = vmatpush2.bf16.msra.mxu0 0
      %605 = vmatprep.subr.bf16.mxu0 0
      %606 = vmatpush2.bf16.msra.mxu0 0
      %607 = vmatprep.subr.bf16.mxu0 0
      %608 = vmatpush2.bf16.msra.mxu0 0
      %609 = vmatprep.subr.bf16.mxu0 0
      %610 = vmatpush2.bf16.msra.mxu0 0
      %611 = vmatprep.subr.bf16.mxu0 0
      %612 = vmatpush2.bf16.msra.mxu0 0
      %613 = vmatprep.mubr.bf16.mxu0 0
      %614 = vmatmul.mubr.bf16.gmra.mxu0 %v575
      %v615 = vpop.f32.mrf.mxu0
      %v616 = vadd.f32 0.0, %v615
      %v617 = vpop.f32.mrf.mxu0
      %v618 = vpop.f32.mrf.mxu0
      %v619 = vpop.f32.mrf.mxu0
      %620 = vdwg.mxu0
      %v621 = vpack.c.bf16 %v616, %v616
      %vm622 = vcmask 60416
      %623 = vst.msk [vmem:[%s389] sm:$0xf] %vm622, %v621
      %p624 = scmp.lt.s32.totalorder %s21, 1
      %s625 = scalar_select %p624, %s21, 1
      %p626 = scmp.lt.s32.totalorder %s22, 3
      %s627 = scalar_select %p626, %s22, 3
      %s628 = smul.addr %s625, 4
      %s629 = sadd.s32 %s627, %s628
      %s630 = smul.addr %s629, 4
      %s631 = scalar_lea.vmem %s6, %s630
      // Predicated region
      $region45: #{mhsa_forward.8} parent=43 // pred_check
        %p632 = pneg %p211
      $region46: #{mhsa_forward.8} parent=43 // pred_check_branch
        %634 = sbr.rel (%p632) target = $region48
      $region47: #{mhsa_forward.8} parent=43 // pred_region
        _
      $region48: #{mhsa_forward.8} parent=43 // pred_fallthru
        _
    $region44: #{mhsa_forward.8} parent=5 // pred_fallthru
      _
    %p635 = scmp.le.s32.totalorder 2, %s12
    // Predicated region
    $region49: #{mhsa_forward.8} parent=5 // pred_check
      %p636 = pneg %p635
    $region50: #{mhsa_forward.8} parent=5 // pred_check_branch
      %638 = sbr.rel (%p636) target = $region52
    $region51: #{mhsa_forward.8} parent=5 // pred_region
      %s639 = ssub.s32 %s12, 2
      // Predicated region
      $region53: #{mhsa_forward.8} parent=51 // pred_check
        %p640 = pneg %p217
      $region54: #{mhsa_forward.8} parent=51 // pred_check_branch
        %642 = sbr.rel (%p640) target = $region56
      $region55: #{mhsa_forward.8} parent=51 // pred_region
        %p643 = scmp.lt.s32.totalorder %s23, 1
        %s644 = scalar_select %p643, %s23, 1
        %p645 = scmp.lt.s32.totalorder %s24, 3
        %s646 = scalar_select %p645, %s24, 3
        %s647 = smul.addr %s644, 4
        %s648 = sadd.s32 %s646, %s647
        %s649 = smul.addr %s648, 4
        %s650 = scalar_lea.vmem %s6, %s649
      $region56: #{mhsa_forward.8} parent=51 // pred_fallthru
        _
    $region52: #{mhsa_forward.8} parent=5 // pred_fallthru
      _
  $region6: #{mhsa_forward.8} parent=0 // loop_footer
    %s16 = sadd.s32 1, %s12
  $region7: #{mhsa_forward.8} parent=0 // loop_footer_branch
    %11 = sbr.rel target = $region3
  $region8: #{mhsa_forward.8} parent=0 // loop_exit
    _

</llo_original>
